<compile_context>
chip_gen: v6e
topology: v6e:2x2x1
jax: 0.10.0
libtpu: 0.0.40
codegen_flags: <defaults>
</compile_context>

<pallas_src>
import functools

import jax
import jax.numpy as jnp
from jax import lax
from jax.experimental import pallas as pl
from jax.experimental.pallas import tpu as pltpu


# ----------------------------------------------------------------------------
# Kernel
# ----------------------------------------------------------------------------
def _mlp_kernel(x_ref, w1_ref, b1_ref, w2_ref, b2_ref, w3_ref, b3_ref,
                out_ref, acc_ref, *, slab):
    k = pl.program_id(1)  # reduction (D) axis, innermost

    # First K-step: seed the fc1 accumulator with the broadcast bias.
    @pl.when(k == 0)
    def _():
        acc_ref[...] = jnp.broadcast_to(b1_ref[...], acc_ref.shape)

    # fc1 partial matmul over this K chunk.  x is streamed from HBM in f32 and
    # cast to bf16 here (no separate XLA cast pass); accumulation stays f32.
    acc_ref[...] += jnp.dot(x_ref[...].astype(jnp.bfloat16), w1_ref[...],
                            preferred_element_type=jnp.float32)

    # Last K-step: ReLU, fc2 + ReLU, fc3 (VPU row-reduction), bias, store.
    @pl.when(k == pl.num_programs(1) - 1)
    def _():
        tb = acc_ref.shape[0]
        n_slabs = tb // slab
        w3f = w3_ref[...].astype(jnp.float32)

        def compute_slab(h1_f32):
            h1 = jnp.maximum(h1_f32, 0.0).astype(jnp.bfloat16)
            h2 = jnp.dot(h1, w2_ref[...], preferred_element_type=jnp.float32)
            h2 = jnp.maximum(h2 + b2_ref[...], 0.0)
            # fc3 has a single output unit: reduce on the VPU instead of an
            # N=1 MXU matmul (which would waste 127/128 of the systolic array).
            y = jnp.sum(h2 * w3f, axis=-1, keepdims=True)
            return (y + b3_ref[...]).astype(out_ref.dtype)

        if n_slabs == 1:
            out_ref[...] = compute_slab(acc_ref[...])
        else:
            # Slab the epilogue so h1/h2 live ranges stay within the vreg file
            # at large batch tiles.
            def body(i, carry):
                r = pl.multiple_of(i * slab, slab)
                out_ref[pl.ds(r, slab), :] = compute_slab(
                    acc_ref[pl.ds(r, slab), :])
                return carry

            lax.fori_loop(0, n_slabs, body, 0)


# ----------------------------------------------------------------------------
# Tiling / VMEM selection
# ----------------------------------------------------------------------------
def _vmem_estimate(tb, block_k, h, o=1):
    """Rough VMEM usage (bytes): double-buffered tiles + resident scratch."""
    f32, bf16 = 4, 2
    nbuf = 2
    x_t = tb * block_k * f32 * nbuf          # x streamed in f32, cast in-kernel
    w1_t = block_k * h * bf16 * nbuf
    w2_t = h * h * bf16 * nbuf               # constant-index block, still 2 bufs
    bias_t = (h * f32 + h * f32 + h * bf16 + o * f32) * nbuf
    acc = tb * h * f32
    out_t = tb * o * f32 * nbuf
    return x_t + w1_t + w2_t + bias_t + acc + out_t


def _hw_config():
    """Generation-aware VMEM budget and minimum number of batch tiles."""
    cap = None
    try:
        cap = getattr(pltpu.get_tpu_info(), "vmem_capacity_bytes", None)
    except Exception:
        cap = None
    if cap is None:
        # Unknown: be conservative (safe on v7x's 64 MiB physical VMEM).
        return 40 * 1024 * 1024, 1
    if cap >= 100 * 1024 * 1024:
        # v5e / v6e: 128 MiB physical, single TensorCore per chip.
        return 90 * 1024 * 1024, 1
    # v7x: 64 MiB physical, 2 TensorCores -> keep >=2 batch tiles when possible.
    return 40 * 1024 * 1024, 2


def _block_k_candidates(d):
    """Divisors of D usable as the fc1 contraction chunk (lane-aligned)."""
    cands = {d}
    for c in range(128, d, 128):
        if d % c == 0:
            cands.add(c)
    return sorted(cands, reverse=True)


def _select_tiles(b, d, h, budget, min_batch_tiles):
    """Pick (tb, block_k).

    Prefers the largest batch tile (fewest HBM re-reads of the dominant w1
    stream) that still admits a reasonably large block_k within the VMEM
    budget; on v7x it keeps >=2 batch tiles so both TensorCores are active.
    """
    bk_cands = _block_k_candidates(d)
    tb_cands = [c for c in (1024, 512, 256, 128, 64, 32, 16, 8)
                if c <= b and b % c == 0 and b // c >= min_batch_tiles]
    if not tb_cands:
        tb_cands = [b]
    bk_floor = min(512, bk_cands[0])

    for tb in tb_cands:  # largest batch tile first
        fits = [bk for bk in bk_cands if _vmem_estimate(tb, bk, h) <= budget]
        if fits and fits[0] >= bk_floor:
            return tb, fits[0]

    tb = tb_cands[-1]
    fits = [bk for bk in bk_cands if _vmem_estimate(tb, bk, h) <= budget]
    return tb, (fits[0] if fits else bk_cands[-1])


# ----------------------------------------------------------------------------
# Forward
# ----------------------------------------------------------------------------
@functools.partial(jax.jit, static_argnames=("tb", "block_k", "vmem_limit"))
def _forward_call(x, w1, b1, w2, b2, w3, b3, *, tb, block_k, vmem_limit):
    B, D = x.shape
    H = w1.shape[1]
    O = b3.shape[1]
    n_b = B // tb
    n_k = D // block_k
    slab = 256 if (tb > 256 and tb % 256 == 0) else tb

    return pl.pallas_call(
        functools.partial(_mlp_kernel, slab=slab),
        out_shape=jax.ShapeDtypeStruct((B, O), jnp.float32),
        grid_spec=pltpu.PrefetchScalarGridSpec(
            num_scalar_prefetch=0,
            grid=(n_b, n_k),
            in_specs=[
                pl.BlockSpec((tb, block_k), lambda b, k: (b, k)),   # x chunk (f32)
                pl.BlockSpec((block_k, H), lambda b, k: (k, 0)),    # w1 chunk (bf16)
                pl.BlockSpec((1, H), lambda b, k: (0, 0)),          # b1 (f32)
                pl.BlockSpec((H, H), lambda b, k: (0, 0)),          # w2 (bf16)
                pl.BlockSpec((1, H), lambda b, k: (0, 0)),          # b2 (f32)
                pl.BlockSpec((1, H), lambda b, k: (0, 0)),          # w3 row (bf16)
                pl.BlockSpec((1, O), lambda b, k: (0, 0)),          # b3 (f32)
            ],
            out_specs=pl.BlockSpec((tb, O), lambda b, k: (b, 0)),
            scratch_shapes=[pltpu.VMEM((tb, H), jnp.float32)],      # fc1 acc
        ),
        compiler_params=pltpu.CompilerParams(
            dimension_semantics=("parallel", "arbitrary"),
            vmem_limit_bytes=vmem_limit),
    )(x, w1, b1, w2, b2, w3, b3)


def prepare_params(w1, b1, w2, b2, w3, b3):
    """One-time parameter prep (do this at init, NOT per call).

    Weights are expected pre-transposed from PyTorch's (out, in) layout to
    (in, out): w1 (D, H), w2 (H, H), w3 (H, 1).  Casting to bf16 happens here
    exactly once, so the jitted forward has no per-call conversion passes.
    """
    H = w1.shape[1]
    O = w3.shape[1]
    return dict(
        w1=jnp.asarray(w1, jnp.bfloat16),
        b1=jnp.asarray(b1, jnp.float32).reshape(1, H),
        w2=jnp.asarray(w2, jnp.bfloat16),
        b2=jnp.asarray(b2, jnp.float32).reshape(1, H),
        w3=jnp.asarray(w3, jnp.bfloat16).reshape(1, H),  # row layout for VPU reduce
        b3=jnp.asarray(b3, jnp.float32).reshape(1, O),
    )


def covid_mlp_forward(x, params):
    """Fused CovidMLP forward.  x: (B, D) float32, params from prepare_params."""
    B, D = x.shape
    H = params["w1"].shape[1]
    assert params["b3"].shape[1] == 1, "kernel specialised for 1 output unit"

    budget, min_batch_tiles = _hw_config()
    tb, block_k = _select_tiles(B, D, H, budget, min_batch_tiles)
    assert B % tb == 0 and D % block_k == 0, (B, tb, D, block_k)

    vmem_limit = int(max(32 * 1024 * 1024,
                         _vmem_estimate(tb, block_k, H) + 8 * 1024 * 1024))

    return _forward_call(x, params["w1"], params["b1"], params["w2"],
                         params["b2"], params["w3"], params["b3"],
                         tb=tb, block_k=block_k, vmem_limit=vmem_limit)


# ----------------------------------------------------------------------------
# Reference + self-check
# ----------------------------------------------------------------------------
def _init_linear(key, in_dim, out_dim):
    """nn.Linear-style init; weight returned pre-transposed as (in, out)."""
    k_w, k_b = jax.random.split(key)
    bound = 1.0 / jnp.sqrt(in_dim)
    w = jax.random.uniform(k_w, (in_dim, out_dim), jnp.float32, -bound, bound)
    b = jax.random.uniform(k_b, (1, out_dim), jnp.float32, -bound, bound)
    return w, b


def _reference(x, params):
    """Pure-JAX reference using the SAME bf16 parameters as the kernel."""
    h1 = jnp.maximum(
        jnp.dot(x.astype(jnp.bfloat16), params["w1"],
                preferred_element_type=jnp.float32) + params["b1"], 0.0)
    h2 = jnp.dot(h1.astype(jnp.bfloat16), params["w2"],
                 preferred_element_type=jnp.float32)
    h2 = jnp.maximum(h2 + params["b2"], 0.0)
    y = jnp.sum(h2 * params["w3"].astype(jnp.float32), axis=-1, keepdims=True)
    return y + params["b3"]


if __name__ == "__main__":
    # Small shapes consistent with the module's forward (real D is
    # 224*224*3 = 150528; here a small 3*16*16 = 768 synthetic stand-in).
    # NOTE: at the real D, x/w quantisation to bf16 should be validated against
    # an f32 PyTorch reference with an explicitly chosen tolerance.
    B = 8
    D = 3 * 16 * 16
    H = 512
    O = 1

    root = jax.random.PRNGKey(0)
    kx, k1, k2, k3 = jax.random.split(root, 4)

    x = jax.random.normal(kx, (B, D), jnp.float32)
    w1, b1 = _init_linear(k1, D, H)
    w2, b2 = _init_linear(k2, H, H)
    w3, b3 = _init_linear(k3, H, O)

    params = prepare_params(w1, b1, w2, b2, w3, b3)   # one-time bf16 cast

    out = covid_mlp_forward(x, params)
    out = jax.block_until_ready(out)

    ref = _reference(x, params)
    assert out.shape == (B, O)
    max_err = float(jnp.max(jnp.abs(out - ref)))
    assert jnp.allclose(out, ref, atol=1e-2, rtol=1e-2), (
        "mismatch vs reference", max_err)

    print("KERNEL_OK")
</pallas_src>

<mosaic_0001>
module attributes {stable_mosaic.version = 11 : i64} {
  func.func @_mlp_kernel(%arg0: i32, %arg1: i32, %arg2: memref<8x768xf32, #tpu.memory_space<vmem>>, %arg3: memref<768x512xbf16, #tpu.memory_space<vmem>>, %arg4: memref<1x512xf32, #tpu.memory_space<vmem>>, %arg5: memref<512x512xbf16, #tpu.memory_space<vmem>>, %arg6: memref<1x512xf32, #tpu.memory_space<vmem>>, %arg7: memref<1x512xbf16, #tpu.memory_space<vmem>>, %arg8: memref<1x1xf32, #tpu.memory_space<vmem>>, %arg9: memref<8x1xf32, #tpu.memory_space<vmem>>, %arg10: memref<8x512xf32, #tpu.memory_space<vmem>>) attributes {dimension_semantics = [#tpu.dimension_semantics<parallel>, #tpu.dimension_semantics<arbitrary>], iteration_bounds = array<i64: 1, 1>, scalar_prefetch = 0 : i64, scratch_operands = 1 : i64, tpu.core_type = #tpu.core_type<tc>, window_params = [{transform_indices = @transform_0, window_bounds = array<i64: 8, 768>}, {transform_indices = @transform_1, window_bounds = array<i64: 768, 512>}, {pipeline_mode = #tpu.pipeline_mode<synchronous>, transform_indices = @transform_2, window_bounds = array<i64: 1, 512>}, {pipeline_mode = #tpu.pipeline_mode<synchronous>, transform_indices = @transform_3, window_bounds = array<i64: 512, 512>}, {pipeline_mode = #tpu.pipeline_mode<synchronous>, transform_indices = @transform_4, window_bounds = array<i64: 1, 512>}, {pipeline_mode = #tpu.pipeline_mode<synchronous>, transform_indices = @transform_5, window_bounds = array<i64: 1, 512>}, {pipeline_mode = #tpu.pipeline_mode<synchronous>, transform_indices = @transform_6, window_bounds = array<i64: 1, 1>}, {transform_indices = @transform_7, window_bounds = array<i64: 8, 1>}]} {
    %c0_i32 = arith.constant 0 : i32
    %0 = arith.cmpi eq, %arg1, %c0_i32 : i32
    %1 = arith.extui %0 : i1 to i32
    %c0_i32_0 = arith.constant 0 : i32
    %2 = arith.cmpi ne, %1, %c0_i32_0 : i32
    scf.if %2 {
      %c0_10 = arith.constant 0 : index
      %c0_11 = arith.constant 0 : index
      %13 = vector.load %arg4[%c0_10, %c0_11] : memref<1x512xf32, #tpu.memory_space<vmem>>, vector<1x512xf32>
      %14 = vector.shape_cast %13 : vector<1x512xf32> to vector<1x512xf32>
      %15 = vector.broadcast %14 : vector<1x512xf32> to vector<8x512xf32>
      %c0_12 = arith.constant 0 : index
      %c0_13 = arith.constant 0 : index
      %16 = vector.load %arg10[%c0_12, %c0_13] : memref<8x512xf32, #tpu.memory_space<vmem>>, vector<8x512xf32>
      tpu.vector_store %arg10[%c0_12, %c0_13], %15 {strides = array<i32>} : memref<8x512xf32, #tpu.memory_space<vmem>>, vector<8x512xf32>,
    } else {
    }
    %c0 = arith.constant 0 : index
    %c0_1 = arith.constant 0 : index
    %3 = vector.load %arg10[%c0, %c0_1] : memref<8x512xf32, #tpu.memory_space<vmem>>, vector<8x512xf32>
    %c0_2 = arith.constant 0 : index
    %c0_3 = arith.constant 0 : index
    %4 = vector.load %arg2[%c0_2, %c0_3] : memref<8x768xf32, #tpu.memory_space<vmem>>, vector<8x768xf32>
    %5 = arith.truncf %4 : vector<8x768xf32> to vector<8x768xbf16>
    %c0_4 = arith.constant 0 : index
    %c0_5 = arith.constant 0 : index
    %6 = vector.load %arg3[%c0_4, %c0_5] : memref<768x512xbf16, #tpu.memory_space<vmem>>, vector<768x512xbf16>
    %cst = arith.constant dense<0.000000e+00> : vector<8x512xf32>
    %7 = tpu.matmul %5, %6, %cst {dimension_numbers = #tpu.dot_dimension_numbers<[1], [0], [0], [1], [0, 0, 1, 1], [], []>} : vector<8x768xbf16>, vector<768x512xbf16>, vector<8x512xf32> -> vector<8x512xf32>
    %8 = arith.addf %3, %7 : vector<8x512xf32>
    %c0_6 = arith.constant 0 : index
    %c0_7 = arith.constant 0 : index
    %9 = vector.load %arg10[%c0_6, %c0_7] : memref<8x512xf32, #tpu.memory_space<vmem>>, vector<8x512xf32>
    tpu.vector_store %arg10[%c0_6, %c0_7], %8 {strides = array<i32>} : memref<8x512xf32, #tpu.memory_space<vmem>>, vector<8x512xf32>,
    %c0_i32_8 = arith.constant 0 : i32
    %10 = arith.cmpi eq, %arg1, %c0_i32_8 : i32
    %11 = arith.extui %10 : i1 to i32
    %c0_i32_9 = arith.constant 0 : i32
    %12 = arith.cmpi ne, %11, %c0_i32_9 : i32
    scf.if %12 {
      %c0_10 = arith.constant 0 : index
      %c0_11 = arith.constant 0 : index
      %13 = vector.load %arg7[%c0_10, %c0_11] : memref<1x512xbf16, #tpu.memory_space<vmem>>, vector<1x512xbf16>
      %14 = arith.extf %13 : vector<1x512xbf16> to vector<1x512xf32>
      %c0_12 = arith.constant 0 : index
      %c0_13 = arith.constant 0 : index
      %15 = vector.load %arg10[%c0_12, %c0_13] : memref<8x512xf32, #tpu.memory_space<vmem>>, vector<8x512xf32>
      %cst_14 = arith.constant 0.000000e+00 : f32
      %16 = vector.broadcast %cst_14 : f32 to vector<8x512xf32>
      %17 = arith.maximumf %15, %16 : vector<8x512xf32>
      %18 = arith.truncf %17 : vector<8x512xf32> to vector<8x512xbf16>
      %c0_15 = arith.constant 0 : index
      %c0_16 = arith.constant 0 : index
      %19 = vector.load %arg5[%c0_15, %c0_16] : memref<512x512xbf16, #tpu.memory_space<vmem>>, vector<512x512xbf16>
      %cst_17 = arith.constant dense<0.000000e+00> : vector<8x512xf32>
      %20 = tpu.matmul %18, %19, %cst_17 {dimension_numbers = #tpu.dot_dimension_numbers<[1], [0], [0], [1], [0, 0, 1, 1], [], []>} : vector<8x512xbf16>, vector<512x512xbf16>, vector<8x512xf32> -> vector<8x512xf32>
      %c0_18 = arith.constant 0 : index
      %c0_19 = arith.constant 0 : index
      %21 = vector.load %arg6[%c0_18, %c0_19] : memref<1x512xf32, #tpu.memory_space<vmem>>, vector<1x512xf32>
      %22 = vector.broadcast %21 : vector<1x512xf32> to vector<8x512xf32>
      %23 = arith.addf %20, %22 : vector<8x512xf32>
      %cst_20 = arith.constant 0.000000e+00 : f32
      %24 = vector.broadcast %cst_20 : f32 to vector<8x512xf32>
      %25 = arith.maximumf %23, %24 : vector<8x512xf32>
      %26 = vector.broadcast %14 : vector<1x512xf32> to vector<8x512xf32>
      %27 = arith.mulf %25, %26 : vector<8x512xf32>
      %cst_21 = arith.constant dense<0.000000e+00> : vector<8xf32>
      %28 = vector.multi_reduction <add>, %27, %cst_21 [1] : vector<8x512xf32> to vector<8xf32>
      %29 = vector.shape_cast %28 : vector<8xf32> to vector<8x1xf32>
      %c0_22 = arith.constant 0 : index
      %c0_23 = arith.constant 0 : index
      %30 = vector.load %arg8[%c0_22, %c0_23] : memref<1x1xf32, #tpu.memory_space<vmem>>, vector<1x1xf32>
      %31 = vector.broadcast %30 : vector<1x1xf32> to vector<8x1xf32>
      %32 = arith.addf %29, %31 : vector<8x1xf32>
      %c0_24 = arith.constant 0 : index
      %c0_25 = arith.constant 0 : index
      %33 = vector.load %arg9[%c0_24, %c0_25] : memref<8x1xf32, #tpu.memory_space<vmem>>, vector<8x1xf32>
      tpu.vector_store %arg9[%c0_24, %c0_25], %32 {strides = array<i32>} : memref<8x1xf32, #tpu.memory_space<vmem>>, vector<8x1xf32>,
    } else {
    }
    return
  }
  func.func @transform_0(%arg0: i32, %arg1: i32) -> (i32, i32) {
    %c0_i32 = arith.constant 0 : i32
    return %arg0, %arg1 : i32, i32
  }
  func.func @transform_1(%arg0: i32, %arg1: i32) -> (i32, i32) {
    %c0_i32 = arith.constant 0 : i32
    %c0_i32_0 = arith.constant 0 : i32
    return %arg1, %c0_i32 : i32, i32
  }
  func.func @transform_2(%arg0: i32, %arg1: i32) -> (i32, i32) {
    %c0_i32 = arith.constant 0 : i32
    %c0_i32_0 = arith.constant 0 : i32
    %c0_i32_1 = arith.constant 0 : i32
    return %c0_i32, %c0_i32_0 : i32, i32
  }
  func.func @transform_3(%arg0: i32, %arg1: i32) -> (i32, i32) {
    %c0_i32 = arith.constant 0 : i32
    %c0_i32_0 = arith.constant 0 : i32
    %c0_i32_1 = arith.constant 0 : i32
    return %c0_i32, %c0_i32_0 : i32, i32
  }
  func.func @transform_4(%arg0: i32, %arg1: i32) -> (i32, i32) {
    %c0_i32 = arith.constant 0 : i32
    %c0_i32_0 = arith.constant 0 : i32
    %c0_i32_1 = arith.constant 0 : i32
    return %c0_i32, %c0_i32_0 : i32, i32
  }
  func.func @transform_5(%arg0: i32, %arg1: i32) -> (i32, i32) {
    %c0_i32 = arith.constant 0 : i32
    %c0_i32_0 = arith.constant 0 : i32
    %c0_i32_1 = arith.constant 0 : i32
    return %c0_i32, %c0_i32_0 : i32, i32
  }
  func.func @transform_6(%arg0: i32, %arg1: i32) -> (i32, i32) {
    %c0_i32 = arith.constant 0 : i32
    %c0_i32_0 = arith.constant 0 : i32
    %c0_i32_1 = arith.constant 0 : i32
    return %c0_i32, %c0_i32_0 : i32, i32
  }
  func.func @transform_7(%arg0: i32, %arg1: i32) -> (i32, i32) {
    %c0_i32 = arith.constant 0 : i32
    %c0_i32_0 = arith.constant 0 : i32
    return %arg0, %c0_i32 : i32, i32
  }
}

</mosaic_0001>

<llo_original>
// kernel: _forward_call.1
$region0: #{_forward_call.1}
  #allocation0 [shape = 'u32[]', space=smem, size = 0x4, offset = 0x4, fixed_abs, tag = 'smem constant byte address 0x4 - core index']
  #allocation1 [shape = 'u32[144,128]{1,0:T(1,128)}', space=vmem, size = 0x12000, scoped, tag = 'internal scratch']
  #allocation2 [shape = 'f32[8,512]{1,0:T(8,128)}', space=vmem, size = 0x4000, scoped, tag = 'scratch operand']
  #allocation3 [shape = 'f32[1,1]{1,0:T(1,128)S(1)}', space=vmem, size = 0x200, scoped, tag = 'scoped memory for _forward_call.1']
  %s0 = inlined_call_operand.hbm [shape: f32[8,768], index: 0, kind: input, shape index: {}]
  %s1 = inlined_call_operand.hbm [shape: bf16[768,512], index: 1, kind: input, shape index: {}]
  %s2 = inlined_call_operand.vmem [shape: f32[1,512], index: 2, kind: input, shape index: {}]
  %s3 = inlined_call_operand.hbm [shape: bf16[512,512], index: 3, kind: input, shape index: {}]
  %s4 = inlined_call_operand.vmem [shape: f32[1,512], index: 4, kind: input, shape index: {}]
  %s5 = inlined_call_operand.hbm [shape: bf16[1,512], index: 5, kind: input, shape index: {}]
  %s6 = inlined_call_operand.<no memory space> [shape: f32[1,1], index: 6, kind: input, shape index: {}]
  %s7 = inlined_call_operand.vmem [shape: f32[8,1], index: 7, kind: output, shape index: {}]
  %s8 = sld [smem:[#allocation0]]
  $region62: #{_forward_call.1} parent=0
    _
  %s10 = ssub.s32 1, %s8
  %s11 = scalar_select 0, %s10, %s8
  %v12 = vstv %s6
  %13 = vst [vmem:[#allocation3] sm:$0x1] %v12
  $region1: #{_forward_call.1} parent=0
    #allocation4 [shape = 'u8[24576]{0}', space=vmem, size = 0x6000, scoped, tag = 'input window, operand 0, single buffered']
    #allocation5 [shape = 's32[1]{0}', space=sflag, size = 0x4, scoped, tag = 'scoped memory for _forward_call.1']
    #allocation6 [shape = 'u8[786432]{0}', space=vmem, size = 0xc0000, scoped, tag = 'input window, operand 1, single buffered']
    #allocation7 [shape = 's32[1]{0}', space=sflag, size = 0x4, scoped, tag = 'scoped memory for _forward_call.1']
    #allocation8 [shape = 'u8[524288]{0}', space=vmem, size = 0x80000, scoped, tag = 'input window, operand 3, single buffered']
    #allocation9 [shape = 'u8[2048]{0}', space=vmem, size = 0x800, scoped, tag = 'input window, operand 5, single buffered']
    #allocation10 [shape = 's32[1]{0}', space=sflag, size = 0x4, scoped, tag = 'scoped memory for _forward_call.1']
    %14 = vsyncpa [#allocation5], 0
    %15 = vsyncpa [#allocation7], 0
    %16 = vsyncpa [#allocation10], 0
    // Predicated region
    $region2: #{_forward_call.1} parent=1 // pred_check
      _
    $region3: #{_forward_call.1} parent=1 // pred_check_branch
      %18 = sbr.rel (0) target = $region5
    $region4: #{_forward_call.1} parent=1 // pred_region
      %s20 = ssub.s32 768, 768
      %21 = vsyncadd [#allocation5], %s20
      %s23 = sshll.u32 [#allocation4], 4
      %s24 = int_to_ptr.vmem [resolvable:$true] %s23
      %26 = dma.hbm_to_vmem [thread:$0]  %s0, 768, %s24, [#allocation5]
    $region5: #{_forward_call.1} parent=1 // pred_fallthru
      _
    // Predicated region
    $region6: #{_forward_call.1} parent=1 // pred_check
      _
    $region7: #{_forward_call.1} parent=1 // pred_check_branch
      %28 = sbr.rel (0) target = $region9
    $region8: #{_forward_call.1} parent=1 // pred_region
      %s30 = ssub.s32 24576, 24576
      %31 = vsyncadd [#allocation7], %s30
      %s32 = sshll.u32 [#allocation6], 4
      %s33 = int_to_ptr.vmem [resolvable:$true] %s32
      %38 = dma.hbm_to_vmem [thread:$0]  %s1, 24576, %s33, [#allocation7], 256, 256, 16
    $region9: #{_forward_call.1} parent=1 // pred_fallthru
      _
    // Predicated region
    $region10: #{_forward_call.1} parent=1 // pred_check
      _
    $region11: #{_forward_call.1} parent=1 // pred_check_branch
      %40 = sbr.rel (0) target = $region13
    $region12: #{_forward_call.1} parent=1 // pred_region
      _
    $region13: #{_forward_call.1} parent=1 // pred_fallthru
      _
    // Predicated region
    $region14: #{_forward_call.1} parent=1 // pred_check
      _
    $region15: #{_forward_call.1} parent=1 // pred_check_branch
      %42 = sbr.rel (0) target = $region17
    $region16: #{_forward_call.1} parent=1 // pred_region
      %s44 = ssub.s32 16384, 16384
      %45 = vsyncadd [#allocation7], %s44
      %s46 = sshll.u32 [#allocation8], 4
      %s47 = int_to_ptr.vmem [resolvable:$true] %s46
      %52 = dma.hbm_to_vmem [thread:$0]  %s3, 16384, %s47, [#allocation7], 256, 256, 16
    $region17: #{_forward_call.1} parent=1 // pred_fallthru
      _
    // Predicated region
    $region18: #{_forward_call.1} parent=1 // pred_check
      _
    $region19: #{_forward_call.1} parent=1 // pred_check_branch
      %54 = sbr.rel (0) target = $region21
    $region20: #{_forward_call.1} parent=1 // pred_region
      _
    $region21: #{_forward_call.1} parent=1 // pred_fallthru
      _
    // Predicated region
    $region22: #{_forward_call.1} parent=1 // pred_check
      _
    $region23: #{_forward_call.1} parent=1 // pred_check_branch
      %56 = sbr.rel (0) target = $region25
    $region24: #{_forward_call.1} parent=1 // pred_region
      %s58 = ssub.s32 64, 64
      %59 = vsyncadd [#allocation10], %s58
      %s61 = sshll.u32 [#allocation9], 4
      %s62 = int_to_ptr.vmem [resolvable:$true] %s61
      %64 = dma.hbm_to_vmem [thread:$0]  %s5, 64, %s62, [#allocation10]
    $region25: #{_forward_call.1} parent=1 // pred_fallthru
      _
    // Predicated region
    $region26: #{_forward_call.1} parent=1 // pred_check
      _
    $region27: #{_forward_call.1} parent=1 // pred_check_branch
      %66 = sbr.rel (0) target = $region29
    $region28: #{_forward_call.1} parent=1 // pred_region
      _
    $region29: #{_forward_call.1} parent=1 // pred_fallthru
      _
    // Predicated region
    $region30: #{_forward_call.1} parent=1 // pred_check
      _
    $region31: #{_forward_call.1} parent=1 // pred_check_branch
      %68 = sbr.rel (0) target = $region33
    $region32: #{_forward_call.1} parent=1 // pred_region
      %69 = dma.done [#allocation5], 768
    $region33: #{_forward_call.1} parent=1 // pred_fallthru
      _
    // Predicated region
    $region34: #{_forward_call.1} parent=1 // pred_check
      _
    $region35: #{_forward_call.1} parent=1 // pred_check_branch
      %71 = sbr.rel (0) target = $region37
    $region36: #{_forward_call.1} parent=1 // pred_region
      %72 = dma.done [#allocation7], 24576
    $region37: #{_forward_call.1} parent=1 // pred_fallthru
      _
    // Predicated region
    $region38: #{_forward_call.1} parent=1 // pred_check
      _
    $region39: #{_forward_call.1} parent=1 // pred_check_branch
      %74 = sbr.rel (0) target = $region41
    $region40: #{_forward_call.1} parent=1 // pred_region
      %75 = dma.done [#allocation7], 16384
    $region41: #{_forward_call.1} parent=1 // pred_fallthru
      _
    // Predicated region
    $region42: #{_forward_call.1} parent=1 // pred_check
      _
    $region43: #{_forward_call.1} parent=1 // pred_check_branch
      %77 = sbr.rel (0) target = $region45
    $region44: #{_forward_call.1} parent=1 // pred_region
      %78 = dma.done [#allocation10], 64
    $region45: #{_forward_call.1} parent=1 // pred_fallthru
      _
    %p79 = scmp.eq.s32.totalorder 0, 0
    // Predicated region
    $region46: #{_forward_call.1} parent=1 // pred_check
      %p80 = pneg %p79
    $region47: #{_forward_call.1} parent=1 // pred_check_branch
      %82 = sbr.rel (%p80) target = $region49
    $region48: #{_forward_call.1} parent=1 // pred_region
      %v83 = vld [vmem:[%s2] sm:$0xf]
      %v85 = vlaneseq
      %v86 = vshrl.u32 %v85, 7
      %v87 = vsub.s32 0, %v86
      %v88 = vrot.slane %v83, %v87
      %v89 = vlaneseq
      %v90 = vshrl.u32 %v89, 7
      %v91 = vsub.s32 1, %v90
      %v92 = vrot.slane %v83, %v91
      %v93 = vlaneseq
      %v94 = vshrl.u32 %v93, 7
      %v95 = vsub.s32 2, %v94
      %v96 = vrot.slane %v83, %v95
      %v97 = vlaneseq
      %v98 = vshrl.u32 %v97, 7
      %v99 = vsub.s32 3, %v98
      %v100 = vrot.slane %v83, %v99
      %105 = vst [vmem:[#allocation2] sm:$0xff] %v88
      %106 = vst [vmem:[#allocation2 + $0x8] sm:$0xff] %v92
      %107 = vst [vmem:[#allocation2 + $0x10] sm:$0xff] %v96
      %108 = vst [vmem:[#allocation2 + $0x18] sm:$0xff] %v100
    $region49: #{_forward_call.1} parent=1 // pred_fallthru
      _
    %v109 = vld [vmem:[#allocation2] sm:$0xff]
    %v110 = vld [vmem:[#allocation2 + $0x8] sm:$0xff]
    %v111 = vld [vmem:[#allocation2 + $0x10] sm:$0xff]
    %v112 = vld [vmem:[#allocation2 + $0x18] sm:$0xff]
    %v113 = vld [vmem:[#allocation4] sm:$0xff]
    %v114 = vld [vmem:[#allocation4 + $0x8] sm:$0xff]
    %v115 = vld [vmem:[#allocation4 + $0x10] sm:$0xff]
    %v116 = vld [vmem:[#allocation4 + $0x18] sm:$0xff]
    %v117 = vld [vmem:[#allocation4 + $0x20] sm:$0xff]
    %v118 = vld [vmem:[#allocation4 + $0x28] sm:$0xff]
    %v119 = vpack.c.bf16 %v113, %v113
    %v120 = vpack.c.bf16 %v114, %v114
    %v121 = vpack.c.bf16 %v115, %v115
    %v122 = vpack.c.bf16 %v116, %v116
    %v123 = vpack.c.bf16 %v117, %v117
    %v124 = vpack.c.bf16 %v118, %v118
    %v125 = vld [vmem:[#allocation6] sm:$0xff]
    %v126 = vld [vmem:[#allocation6 + $0x8] sm:$0xff]
    %v127 = vld [vmem:[#allocation6 + $0x10] sm:$0xff]
    %v128 = vld [vmem:[#allocation6 + $0x18] sm:$0xff]
    %v129 = vld [vmem:[#allocation6 + $0x20] sm:$0xff]
    %v130 = vld [vmem:[#allocation6 + $0x28] sm:$0xff]
    %v131 = vld [vmem:[#allocation6 + $0x30] sm:$0xff]
    %v132 = vld [vmem:[#allocation6 + $0x38] sm:$0xff]
    %v133 = vld [vmem:[#allocation6 + $0x40] sm:$0xff]
    %v134 = vld [vmem:[#allocation6 + $0x48] sm:$0xff]
    %v135 = vld [vmem:[#allocation6 + $0x50] sm:$0xff]
    %v136 = vld [vmem:[#allocation6 + $0x58] sm:$0xff]
    %v137 = vld [vmem:[#allocation6 + $0x60] sm:$0xff]
    %v138 = vld [vmem:[#allocation6 + $0x68] sm:$0xff]
    %v139 = vld [vmem:[#allocation6 + $0x70] sm:$0xff]
    %v140 = vld [vmem:[#allocation6 + $0x78] sm:$0xff]
    %v141 = vld [vmem:[#allocation6 + $0x80] sm:$0xff]
    %v142 = vld [vmem:[#allocation6 + $0x88] sm:$0xff]
    %v143 = vld [vmem:[#allocation6 + $0x90] sm:$0xff]
    %v144 = vld [vmem:[#allocation6 + $0x98] sm:$0xff]
    %v145 = vld [vmem:[#allocation6 + $0xa0] sm:$0xff]
    %v146 = vld [vmem:[#allocation6 + $0xa8] sm:$0xff]
    %v147 = vld [vmem:[#allocation6 + $0xb0] sm:$0xff]
    %v148 = vld [vmem:[#allocation6 + $0xb8] sm:$0xff]
    %v149 = vld [vmem:[#allocation6 + $0xc0] sm:$0xff]
    %v150 = vld [vmem:[#allocation6 + $0xc8] sm:$0xff]
    %v151 = vld [vmem:[#allocation6 + $0xd0] sm:$0xff]
    %v152 = vld [vmem:[#allocation6 + $0xd8] sm:$0xff]
    %v153 = vld [vmem:[#allocation6 + $0xe0] sm:$0xff]
    %v154 = vld [vmem:[#allocation6 + $0xe8] sm:$0xff]
    %v155 = vld [vmem:[#allocation6 + $0xf0] sm:$0xff]
    %v156 = vld [vmem:[#allocation6 + $0xf8] sm:$0xff]
    %v157 = vld [vmem:[#allocation6 + $0x100] sm:$0xff]
    %v158 = vld [vmem:[#allocation6 + $0x108] sm:$0xff]
    %v159 = vld [vmem:[#allocation6 + $0x110] sm:$0xff]
    %v160 = vld [vmem:[#allocation6 + $0x118] sm:$0xff]
    %v161 = vld [vmem:[#allocation6 + $0x120] sm:$0xff]
    %v162 = vld [vmem:[#allocation6 + $0x128] sm:$0xff]
    %v163 = vld [vmem:[#allocation6 + $0x130] sm:$0xff]
    %v164 = vld [vmem:[#allocation6 + $0x138] sm:$0xff]
    %v165 = vld [vmem:[#allocation6 + $0x140] sm:$0xff]
    %v166 = vld [vmem:[#allocation6 + $0x148] sm:$0xff]
    %v167 = vld [vmem:[#allocation6 + $0x150] sm:$0xff]
    %v168 = vld [vmem:[#allocation6 + $0x158] sm:$0xff]
    %v169 = vld [vmem:[#allocation6 + $0x160] sm:$0xff]
    %v170 = vld [vmem:[#allocation6 + $0x168] sm:$0xff]
    %v171 = vld [vmem:[#allocation6 + $0x170] sm:$0xff]
    %v172 = vld [vmem:[#allocation6 + $0x178] sm:$0xff]
    %v173 = vld [vmem:[#allocation6 + $0x180] sm:$0xff]
    %v174 = vld [vmem:[#allocation6 + $0x188] sm:$0xff]
    %v175 = vld [vmem:[#allocation6 + $0x190] sm:$0xff]
    %v176 = vld [vmem:[#allocation6 + $0x198] sm:$0xff]
    %v177 = vld [vmem:[#allocation6 + $0x1a0] sm:$0xff]
    %v178 = vld [vmem:[#allocation6 + $0x1a8] sm:$0xff]
    %v179 = vld [vmem:[#allocation6 + $0x1b0] sm:$0xff]
    %v180 = vld [vmem:[#allocation6 + $0x1b8] sm:$0xff]
    %v181 = vld [vmem:[#allocation6 + $0x1c0] sm:$0xff]
    %v182 = vld [vmem:[#allocation6 + $0x1c8] sm:$0xff]
    %v183 = vld [vmem:[#allocation6 + $0x1d0] sm:$0xff]
    %v184 = vld [vmem:[#allocation6 + $0x1d8] sm:$0xff]
    %v185 = vld [vmem:[#allocation6 + $0x1e0] sm:$0xff]
    %v186 = vld [vmem:[#allocation6 + $0x1e8] sm:$0xff]
    %v187 = vld [vmem:[#allocation6 + $0x1f0] sm:$0xff]
    %v188 = vld [vmem:[#allocation6 + $0x1f8] sm:$0xff]
    %v189 = vld [vmem:[#allocation6 + $0x200] sm:$0xff]
    %v190 = vld [vmem:[#allocation6 + $0x208] sm:$0xff]
    %v191 = vld [vmem:[#allocation6 + $0x210] sm:$0xff]
    %v192 = vld [vmem:[#allocation6 + $0x218] sm:$0xff]
    %v193 = vld [vmem:[#allocation6 + $0x220] sm:$0xff]
    %v194 = vld [vmem:[#allocation6 + $0x228] sm:$0xff]
    %v195 = vld [vmem:[#allocation6 + $0x230] sm:$0xff]
    %v196 = vld [vmem:[#allocation6 + $0x238] sm:$0xff]
    %v197 = vld [vmem:[#allocation6 + $0x240] sm:$0xff]
    %v198 = vld [vmem:[#allocation6 + $0x248] sm:$0xff]
    %v199 = vld [vmem:[#allocation6 + $0x250] sm:$0xff]
    %v200 = vld [vmem:[#allocation6 + $0x258] sm:$0xff]
    %v201 = vld [vmem:[#allocation6 + $0x260] sm:$0xff]
    %v202 = vld [vmem:[#allocation6 + $0x268] sm:$0xff]
    %v203 = vld [vmem:[#allocation6 + $0x270] sm:$0xff]
    %v204 = vld [vmem:[#allocation6 + $0x278] sm:$0xff]
    %v205 = vld [vmem:[#allocation6 + $0x280] sm:$0xff]
    %v206 = vld [vmem:[#allocation6 + $0x288] sm:$0xff]
    %v207 = vld [vmem:[#allocation6 + $0x290] sm:$0xff]
    %v208 = vld [vmem:[#allocation6 + $0x298] sm:$0xff]
    %v209 = vld [vmem:[#allocation6 + $0x2a0] sm:$0xff]
    %v210 = vld [vmem:[#allocation6 + $0x2a8] sm:$0xff]
    %v211 = vld [vmem:[#allocation6 + $0x2b0] sm:$0xff]
    %v212 = vld [vmem:[#allocation6 + $0x2b8] sm:$0xff]
    %v213 = vld [vmem:[#allocation6 + $0x2c0] sm:$0xff]
    %v214 = vld [vmem:[#allocation6 + $0x2c8] sm:$0xff]
    %v215 = vld [vmem:[#allocation6 + $0x2d0] sm:$0xff]
    %v216 = vld [vmem:[#allocation6 + $0x2d8] sm:$0xff]
    %v217 = vld [vmem:[#allocation6 + $0x2e0] sm:$0xff]
    %v218 = vld [vmem:[#allocation6 + $0x2e8] sm:$0xff]
    %v219 = vld [vmem:[#allocation6 + $0x2f0] sm:$0xff]
    %v220 = vld [vmem:[#allocation6 + $0x2f8] sm:$0xff]
    %v221 = vld [vmem:[#allocation6 + $0x300] sm:$0xff]
    %v222 = vld [vmem:[#allocation6 + $0x308] sm:$0xff]
    %v223 = vld [vmem:[#allocation6 + $0x310] sm:$0xff]
    %v224 = vld [vmem:[#allocation6 + $0x318] sm:$0xff]
    %v225 = vld [vmem:[#allocation6 + $0x320] sm:$0xff]
    %v226 = vld [vmem:[#allocation6 + $0x328] sm:$0xff]
    %v227 = vld [vmem:[#allocation6 + $0x330] sm:$0xff]
    %v228 = vld [vmem:[#allocation6 + $0x338] sm:$0xff]
    %v229 = vld [vmem:[#allocation6 + $0x340] sm:$0xff]
    %v230 = vld [vmem:[#allocation6 + $0x348] sm:$0xff]
    %v231 = vld [vmem:[#allocation6 + $0x350] sm:$0xff]
    %v232 = vld [vmem:[#allocation6 + $0x358] sm:$0xff]
    %v233 = vld [vmem:[#allocation6 + $0x360] sm:$0xff]
    %v234 = vld [vmem:[#allocation6 + $0x368] sm:$0xff]
    %v235 = vld [vmem:[#allocation6 + $0x370] sm:$0xff]
    %v236 = vld [vmem:[#allocation6 + $0x378] sm:$0xff]
    %v237 = vld [vmem:[#allocation6 + $0x380] sm:$0xff]
    %v238 = vld [vmem:[#allocation6 + $0x388] sm:$0xff]
    %v239 = vld [vmem:[#allocation6 + $0x390] sm:$0xff]
    %v240 = vld [vmem:[#allocation6 + $0x398] sm:$0xff]
    %v241 = vld [vmem:[#allocation6 + $0x3a0] sm:$0xff]
    %v242 = vld [vmem:[#allocation6 + $0x3a8] sm:$0xff]
    %v243 = vld [vmem:[#allocation6 + $0x3b0] sm:$0xff]
    %v244 = vld [vmem:[#allocation6 + $0x3b8] sm:$0xff]
    %v245 = vld [vmem:[#allocation6 + $0x3c0] sm:$0xff]
    %v246 = vld [vmem:[#allocation6 + $0x3c8] sm:$0xff]
    %v247 = vld [vmem:[#allocation6 + $0x3d0] sm:$0xff]
    %v248 = vld [vmem:[#allocation6 + $0x3d8] sm:$0xff]
    %v249 = vld [vmem:[#allocation6 + $0x3e0] sm:$0xff]
    %v250 = vld [vmem:[#allocation6 + $0x3e8] sm:$0xff]
    %v251 = vld [vmem:[#allocation6 + $0x3f0] sm:$0xff]
    %v252 = vld [vmem:[#allocation6 + $0x3f8] sm:$0xff]
    %v253 = vld [vmem:[#allocation6 + $0x400] sm:$0xff]
    %v254 = vld [vmem:[#allocation6 + $0x408] sm:$0xff]
    %v255 = vld [vmem:[#allocation6 + $0x410] sm:$0xff]
    %v256 = vld [vmem:[#allocation6 + $0x418] sm:$0xff]
    %v257 = vld [vmem:[#allocation6 + $0x420] sm:$0xff]
    %v258 = vld [vmem:[#allocation6 + $0x428] sm:$0xff]
    %v259 = vld [vmem:[#allocation6 + $0x430] sm:$0xff]
    %v260 = vld [vmem:[#allocation6 + $0x438] sm:$0xff]
    %v261 = vld [vmem:[#allocation6 + $0x440] sm:$0xff]
    %v262 = vld [vmem:[#allocation6 + $0x448] sm:$0xff]
    %v263 = vld [vmem:[#allocation6 + $0x450] sm:$0xff]
    %v264 = vld [vmem:[#allocation6 + $0x458] sm:$0xff]
    %v265 = vld [vmem:[#allocation6 + $0x460] sm:$0xff]
    %v266 = vld [vmem:[#allocation6 + $0x468] sm:$0xff]
    %v267 = vld [vmem:[#allocation6 + $0x470] sm:$0xff]
    %v268 = vld [vmem:[#allocation6 + $0x478] sm:$0xff]
    %v269 = vld [vmem:[#allocation6 + $0x480] sm:$0xff]
    %v270 = vld [vmem:[#allocation6 + $0x488] sm:$0xff]
    %v271 = vld [vmem:[#allocation6 + $0x490] sm:$0xff]
    %v272 = vld [vmem:[#allocation6 + $0x498] sm:$0xff]
    %v273 = vld [vmem:[#allocation6 + $0x4a0] sm:$0xff]
    %v274 = vld [vmem:[#allocation6 + $0x4a8] sm:$0xff]
    %v275 = vld [vmem:[#allocation6 + $0x4b0] sm:$0xff]
    %v276 = vld [vmem:[#allocation6 + $0x4b8] sm:$0xff]
    %v277 = vld [vmem:[#allocation6 + $0x4c0] sm:$0xff]
    %v278 = vld [vmem:[#allocation6 + $0x4c8] sm:$0xff]
    %v279 = vld [vmem:[#allocation6 + $0x4d0] sm:$0xff]
    %v280 = vld [vmem:[#allocation6 + $0x4d8] sm:$0xff]
    %v281 = vld [vmem:[#allocation6 + $0x4e0] sm:$0xff]
    %v282 = vld [vmem:[#allocation6 + $0x4e8] sm:$0xff]
    %v283 = vld [vmem:[#allocation6 + $0x4f0] sm:$0xff]
    %v284 = vld [vmem:[#allocation6 + $0x4f8] sm:$0xff]
    %v285 = vld [vmem:[#allocation6 + $0x500] sm:$0xff]
    %v286 = vld [vmem:[#allocation6 + $0x508] sm:$0xff]
    %v287 = vld [vmem:[#allocation6 + $0x510] sm:$0xff]
    %v288 = vld [vmem:[#allocation6 + $0x518] sm:$0xff]
    %v289 = vld [vmem:[#allocation6 + $0x520] sm:$0xff]
    %v290 = vld [vmem:[#allocation6 + $0x528] sm:$0xff]
    %v291 = vld [vmem:[#allocation6 + $0x530] sm:$0xff]
    %v292 = vld [vmem:[#allocation6 + $0x538] sm:$0xff]
    %v293 = vld [vmem:[#allocation6 + $0x540] sm:$0xff]
    %v294 = vld [vmem:[#allocation6 + $0x548] sm:$0xff]
    %v295 = vld [vmem:[#allocation6 + $0x550] sm:$0xff]
    %v296 = vld [vmem:[#allocation6 + $0x558] sm:$0xff]
    %v297 = vld [vmem:[#allocation6 + $0x560] sm:$0xff]
    %v298 = vld [vmem:[#allocation6 + $0x568] sm:$0xff]
    %v299 = vld [vmem:[#allocation6 + $0x570] sm:$0xff]
    %v300 = vld [vmem:[#allocation6 + $0x578] sm:$0xff]
    %v301 = vld [vmem:[#allocation6 + $0x580] sm:$0xff]
    %v302 = vld [vmem:[#allocation6 + $0x588] sm:$0xff]
    %v303 = vld [vmem:[#allocation6 + $0x590] sm:$0xff]
    %v304 = vld [vmem:[#allocation6 + $0x598] sm:$0xff]
    %v305 = vld [vmem:[#allocation6 + $0x5a0] sm:$0xff]
    %v306 = vld [vmem:[#allocation6 + $0x5a8] sm:$0xff]
    %v307 = vld [vmem:[#allocation6 + $0x5b0] sm:$0xff]
    %v308 = vld [vmem:[#allocation6 + $0x5b8] sm:$0xff]
    %v309 = vld [vmem:[#allocation6 + $0x5c0] sm:$0xff]
    %v310 = vld [vmem:[#allocation6 + $0x5c8] sm:$0xff]
    %v311 = vld [vmem:[#allocation6 + $0x5d0] sm:$0xff]
    %v312 = vld [vmem:[#allocation6 + $0x5d8] sm:$0xff]
    %v313 = vld [vmem:[#allocation6 + $0x5e0] sm:$0xff]
    %v314 = vld [vmem:[#allocation6 + $0x5e8] sm:$0xff]
    %v315 = vld [vmem:[#allocation6 + $0x5f0] sm:$0xff]
    %v316 = vld [vmem:[#allocation6 + $0x5f8] sm:$0xff]
    %v509 = vunpack.c.l.b16 %v125
    %v510 = vunpack.c.h.b16 %v125
    %v511 = vunpack.c.l.b16 %v126
    %v512 = vunpack.c.h.b16 %v126
    %v513 = vunpack.c.l.b16 %v127
    %v514 = vunpack.c.h.b16 %v127
    %v515 = vunpack.c.l.b16 %v128
    %v516 = vunpack.c.h.b16 %v128
    %v517 = vunpack.c.l.b16 %v129
    %v518 = vunpack.c.h.b16 %v129
    %v519 = vunpack.c.l.b16 %v130
    %v520 = vunpack.c.h.b16 %v130
    %v521 = vunpack.c.l.b16 %v131
    %v522 = vunpack.c.h.b16 %v131
    %v523 = vunpack.c.l.b16 %v132
    %v524 = vunpack.c.h.b16 %v132
    %v525 = vunpack.c.l.b16 %v133
    %v526 = vunpack.c.h.b16 %v133
    %v527 = vunpack.c.l.b16 %v134
    %v528 = vunpack.c.h.b16 %v134
    %v529 = vunpack.c.l.b16 %v135
    %v530 = vunpack.c.h.b16 %v135
    %v531 = vunpack.c.l.b16 %v136
    %v532 = vunpack.c.h.b16 %v136
    %v533 = vunpack.c.l.b16 %v137
    %v534 = vunpack.c.h.b16 %v137
    %v535 = vunpack.c.l.b16 %v138
    %v536 = vunpack.c.h.b16 %v138
    %v537 = vunpack.c.l.b16 %v139
    %v538 = vunpack.c.h.b16 %v139
    %v539 = vunpack.c.l.b16 %v140
    %v540 = vunpack.c.h.b16 %v140
    %v541 = vunpack.c.l.b16 %v141
    %v542 = vunpack.c.h.b16 %v141
    %v543 = vunpack.c.l.b16 %v142
    %v544 = vunpack.c.h.b16 %v142
    %v545 = vunpack.c.l.b16 %v143
    %v546 = vunpack.c.h.b16 %v143
    %v547 = vunpack.c.l.b16 %v144
    %v548 = vunpack.c.h.b16 %v144
    %v549 = vunpack.c.l.b16 %v145
    %v550 = vunpack.c.h.b16 %v145
    %v551 = vunpack.c.l.b16 %v146
    %v552 = vunpack.c.h.b16 %v146
    %v553 = vunpack.c.l.b16 %v147
    %v554 = vunpack.c.h.b16 %v147
    %v555 = vunpack.c.l.b16 %v148
    %v556 = vunpack.c.h.b16 %v148
    %v557 = vunpack.c.l.b16 %v149
    %v558 = vunpack.c.h.b16 %v149
    %v559 = vunpack.c.l.b16 %v150
    %v560 = vunpack.c.h.b16 %v150
    %v561 = vunpack.c.l.b16 %v151
    %v562 = vunpack.c.h.b16 %v151
    %v563 = vunpack.c.l.b16 %v152
    %v564 = vunpack.c.h.b16 %v152
    %v565 = vunpack.c.l.b16 %v153
    %v566 = vunpack.c.h.b16 %v153
    %v567 = vunpack.c.l.b16 %v154
    %v568 = vunpack.c.h.b16 %v154
    %v569 = vunpack.c.l.b16 %v155
    %v570 = vunpack.c.h.b16 %v155
    %v571 = vunpack.c.l.b16 %v156
    %v572 = vunpack.c.h.b16 %v156
    %v573 = vunpack.c.l.b16 %v157
    %v574 = vunpack.c.h.b16 %v157
    %v575 = vunpack.c.l.b16 %v158
    %v576 = vunpack.c.h.b16 %v158
    %v577 = vunpack.c.l.b16 %v159
    %v578 = vunpack.c.h.b16 %v159
    %v579 = vunpack.c.l.b16 %v160
    %v580 = vunpack.c.h.b16 %v160
    %v581 = vunpack.c.l.b16 %v161
    %v582 = vunpack.c.h.b16 %v161
    %v583 = vunpack.c.l.b16 %v162
    %v584 = vunpack.c.h.b16 %v162
    %v585 = vunpack.c.l.b16 %v163
    %v586 = vunpack.c.h.b16 %v163
    %v587 = vunpack.c.l.b16 %v164
    %v588 = vunpack.c.h.b16 %v164
    %v589 = vunpack.c.l.b16 %v165
    %v590 = vunpack.c.h.b16 %v165
    %v591 = vunpack.c.l.b16 %v166
    %v592 = vunpack.c.h.b16 %v166
    %v593 = vunpack.c.l.b16 %v167
    %v594 = vunpack.c.h.b16 %v167
    %v595 = vunpack.c.l.b16 %v168
    %v596 = vunpack.c.h.b16 %v168
    %v597 = vunpack.c.l.b16 %v169
    %v598 = vunpack.c.h.b16 %v169
    %v599 = vunpack.c.l.b16 %v170
    %v600 = vunpack.c.h.b16 %v170
    %v601 = vunpack.c.l.b16 %v171
    %v602 = vunpack.c.h.b16 %v171
    %v603 = vunpack.c.l.b16 %v172
    %v604 = vunpack.c.h.b16 %v172
    %v605 = vunpack.c.l.b16 %v173
    %v606 = vunpack.c.h.b16 %v173
    %v607 = vunpack.c.l.b16 %v174
    %v608 = vunpack.c.h.b16 %v174
    %v609 = vunpack.c.l.b16 %v175
    %v610 = vunpack.c.h.b16 %v175
    %v611 = vunpack.c.l.b16 %v176
    %v612 = vunpack.c.h.b16 %v176
    %v613 = vunpack.c.l.b16 %v177
    %v614 = vunpack.c.h.b16 %v177
    %v615 = vunpack.c.l.b16 %v178
    %v616 = vunpack.c.h.b16 %v178
    %v617 = vunpack.c.l.b16 %v179
    %v618 = vunpack.c.h.b16 %v179
    %v619 = vunpack.c.l.b16 %v180
    %v620 = vunpack.c.h.b16 %v180
    %v621 = vunpack.c.l.b16 %v181
    %v622 = vunpack.c.h.b16 %v181
    %v623 = vunpack.c.l.b16 %v182
    %v624 = vunpack.c.h.b16 %v182
    %v625 = vunpack.c.l.b16 %v183
    %v626 = vunpack.c.h.b16 %v183
    %v627 = vunpack.c.l.b16 %v184
    %v628 = vunpack.c.h.b16 %v184
    %v629 = vunpack.c.l.b16 %v185
    %v630 = vunpack.c.h.b16 %v185
    %v631 = vunpack.c.l.b16 %v186
    %v632 = vunpack.c.h.b16 %v186
    %v633 = vunpack.c.l.b16 %v187
    %v634 = vunpack.c.h.b16 %v187
    %v635 = vunpack.c.l.b16 %v188
    %v636 = vunpack.c.h.b16 %v188
    %v637 = vunpack.c.l.b16 %v189
    %v638 = vunpack.c.h.b16 %v189
    %v639 = vunpack.c.l.b16 %v190
    %v640 = vunpack.c.h.b16 %v190
    %v641 = vunpack.c.l.b16 %v191
    %v642 = vunpack.c.h.b16 %v191
    %v643 = vunpack.c.l.b16 %v192
    %v644 = vunpack.c.h.b16 %v192
    %v645 = vunpack.c.l.b16 %v193
    %v646 = vunpack.c.h.b16 %v193
    %v647 = vunpack.c.l.b16 %v194
    %v648 = vunpack.c.h.b16 %v194
    %v649 = vunpack.c.l.b16 %v195
    %v650 = vunpack.c.h.b16 %v195
    %v651 = vunpack.c.l.b16 %v196
    %v652 = vunpack.c.h.b16 %v196
    %v653 = vunpack.c.l.b16 %v197
    %v654 = vunpack.c.h.b16 %v197
    %v655 = vunpack.c.l.b16 %v198
    %v656 = vunpack.c.h.b16 %v198
    %v657 = vunpack.c.l.b16 %v199
    %v658 = vunpack.c.h.b16 %v199
    %v659 = vunpack.c.l.b16 %v200
    %v660 = vunpack.c.h.b16 %v200
    %v661 = vunpack.c.l.b16 %v201
    %v662 = vunpack.c.h.b16 %v201
    %v663 = vunpack.c.l.b16 %v202
    %v664 = vunpack.c.h.b16 %v202
    %v665 = vunpack.c.l.b16 %v203
    %v666 = vunpack.c.h.b16 %v203
    %v667 = vunpack.c.l.b16 %v204
    %v668 = vunpack.c.h.b16 %v204
    %v669 = vunpack.c.l.b16 %v205
    %v670 = vunpack.c.h.b16 %v205
    %v671 = vunpack.c.l.b16 %v206
    %v672 = vunpack.c.h.b16 %v206
    %v673 = vunpack.c.l.b16 %v207
    %v674 = vunpack.c.h.b16 %v207
    %v675 = vunpack.c.l.b16 %v208
    %v676 = vunpack.c.h.b16 %v208
    %v677 = vunpack.c.l.b16 %v209
    %v678 = vunpack.c.h.b16 %v209
    %v679 = vunpack.c.l.b16 %v210
    %v680 = vunpack.c.h.b16 %v210
    %v681 = vunpack.c.l.b16 %v211
    %v682 = vunpack.c.h.b16 %v211
    %v683 = vunpack.c.l.b16 %v212
    %v684 = vunpack.c.h.b16 %v212
    %v685 = vunpack.c.l.b16 %v213
    %v686 = vunpack.c.h.b16 %v213
    %v687 = vunpack.c.l.b16 %v214
    %v688 = vunpack.c.h.b16 %v214
    %v689 = vunpack.c.l.b16 %v215
    %v690 = vunpack.c.h.b16 %v215
    %v691 = vunpack.c.l.b16 %v216
    %v692 = vunpack.c.h.b16 %v216
    %v693 = vunpack.c.l.b16 %v217
    %v694 = vunpack.c.h.b16 %v217
    %v695 = vunpack.c.l.b16 %v218
    %v696 = vunpack.c.h.b16 %v218
    %v697 = vunpack.c.l.b16 %v219
    %v698 = vunpack.c.h.b16 %v219
    %v699 = vunpack.c.l.b16 %v220
    %v700 = vunpack.c.h.b16 %v220
    %v701 = vunpack.c.l.b16 %v221
    %v702 = vunpack.c.h.b16 %v221
    %v703 = vunpack.c.l.b16 %v222
    %v704 = vunpack.c.h.b16 %v222
    %v705 = vunpack.c.l.b16 %v223
    %v706 = vunpack.c.h.b16 %v223
    %v707 = vunpack.c.l.b16 %v224
    %v708 = vunpack.c.h.b16 %v224
    %v709 = vunpack.c.l.b16 %v225
    %v710 = vunpack.c.h.b16 %v225
    %v711 = vunpack.c.l.b16 %v226
    %v712 = vunpack.c.h.b16 %v226
    %v713 = vunpack.c.l.b16 %v227
    %v714 = vunpack.c.h.b16 %v227
    %v715 = vunpack.c.l.b16 %v228
    %v716 = vunpack.c.h.b16 %v228
    %v717 = vunpack.c.l.b16 %v229
    %v718 = vunpack.c.h.b16 %v229
    %v719 = vunpack.c.l.b16 %v230
    %v720 = vunpack.c.h.b16 %v230
    %v721 = vunpack.c.l.b16 %v231
    %v722 = vunpack.c.h.b16 %v231
    %v723 = vunpack.c.l.b16 %v232
    %v724 = vunpack.c.h.b16 %v232
    %v725 = vunpack.c.l.b16 %v233
    %v726 = vunpack.c.h.b16 %v233
    %v727 = vunpack.c.l.b16 %v234
    %v728 = vunpack.c.h.b16 %v234
    %v729 = vunpack.c.l.b16 %v235
    %v730 = vunpack.c.h.b16 %v235
    %v731 = vunpack.c.l.b16 %v236
    %v732 = vunpack.c.h.b16 %v236
    %v733 = vunpack.c.l.b16 %v237
    %v734 = vunpack.c.h.b16 %v237
    %v735 = vunpack.c.l.b16 %v238
    %v736 = vunpack.c.h.b16 %v238
    %v737 = vunpack.c.l.b16 %v239
    %v738 = vunpack.c.h.b16 %v239
    %v739 = vunpack.c.l.b16 %v240
    %v740 = vunpack.c.h.b16 %v240
    %v741 = vunpack.c.l.b16 %v241
    %v742 = vunpack.c.h.b16 %v241
    %v743 = vunpack.c.l.b16 %v242
    %v744 = vunpack.c.h.b16 %v242
    %v745 = vunpack.c.l.b16 %v243
    %v746 = vunpack.c.h.b16 %v243
    %v747 = vunpack.c.l.b16 %v244
    %v748 = vunpack.c.h.b16 %v244
    %v749 = vunpack.c.l.b16 %v245
    %v750 = vunpack.c.h.b16 %v245
    %v751 = vunpack.c.l.b16 %v246
    %v752 = vunpack.c.h.b16 %v246
    %v753 = vunpack.c.l.b16 %v247
    %v754 = vunpack.c.h.b16 %v247
    %v755 = vunpack.c.l.b16 %v248
    %v756 = vunpack.c.h.b16 %v248
    %v757 = vunpack.c.l.b16 %v249
    %v758 = vunpack.c.h.b16 %v249
    %v759 = vunpack.c.l.b16 %v250
    %v760 = vunpack.c.h.b16 %v250
    %v761 = vunpack.c.l.b16 %v251
    %v762 = vunpack.c.h.b16 %v251
    %v763 = vunpack.c.l.b16 %v252
    %v764 = vunpack.c.h.b16 %v252
    %v765 = vunpack.c.l.b16 %v253
    %v766 = vunpack.c.h.b16 %v253
    %v767 = vunpack.c.l.b16 %v254
    %v768 = vunpack.c.h.b16 %v254
    %v769 = vunpack.c.l.b16 %v255
    %v770 = vunpack.c.h.b16 %v255
    %v771 = vunpack.c.l.b16 %v256
    %v772 = vunpack.c.h.b16 %v256
    %v773 = vunpack.c.l.b16 %v257
    %v774 = vunpack.c.h.b16 %v257
    %v775 = vunpack.c.l.b16 %v258
    %v776 = vunpack.c.h.b16 %v258
    %v777 = vunpack.c.l.b16 %v259
    %v778 = vunpack.c.h.b16 %v259
    %v779 = vunpack.c.l.b16 %v260
    %v780 = vunpack.c.h.b16 %v260
    %v781 = vunpack.c.l.b16 %v261
    %v782 = vunpack.c.h.b16 %v261
    %v783 = vunpack.c.l.b16 %v262
    %v784 = vunpack.c.h.b16 %v262
    %v785 = vunpack.c.l.b16 %v263
    %v786 = vunpack.c.h.b16 %v263
    %v787 = vunpack.c.l.b16 %v264
    %v788 = vunpack.c.h.b16 %v264
    %v789 = vunpack.c.l.b16 %v265
    %v790 = vunpack.c.h.b16 %v265
    %v791 = vunpack.c.l.b16 %v266
    %v792 = vunpack.c.h.b16 %v266
    %v793 = vunpack.c.l.b16 %v267
    %v794 = vunpack.c.h.b16 %v267
    %v795 = vunpack.c.l.b16 %v268
    %v796 = vunpack.c.h.b16 %v268
    %v797 = vunpack.c.l.b16 %v269
    %v798 = vunpack.c.h.b16 %v269
    %v799 = vunpack.c.l.b16 %v270
    %v800 = vunpack.c.h.b16 %v270
    %v801 = vunpack.c.l.b16 %v271
    %v802 = vunpack.c.h.b16 %v271
    %v803 = vunpack.c.l.b16 %v272
    %v804 = vunpack.c.h.b16 %v272
    %v805 = vunpack.c.l.b16 %v273
    %v806 = vunpack.c.h.b16 %v273
    %v807 = vunpack.c.l.b16 %v274
    %v808 = vunpack.c.h.b16 %v274
    %v809 = vunpack.c.l.b16 %v275
    %v810 = vunpack.c.h.b16 %v275
    %v811 = vunpack.c.l.b16 %v276
    %v812 = vunpack.c.h.b16 %v276
    %v813 = vunpack.c.l.b16 %v277
    %v814 = vunpack.c.h.b16 %v277
    %v815 = vunpack.c.l.b16 %v278
    %v816 = vunpack.c.h.b16 %v278
    %v817 = vunpack.c.l.b16 %v279
    %v818 = vunpack.c.h.b16 %v279
    %v819 = vunpack.c.l.b16 %v280
    %v820 = vunpack.c.h.b16 %v280
    %v821 = vunpack.c.l.b16 %v281
    %v822 = vunpack.c.h.b16 %v281
    %v823 = vunpack.c.l.b16 %v282
    %v824 = vunpack.c.h.b16 %v282
    %v825 = vunpack.c.l.b16 %v283
    %v826 = vunpack.c.h.b16 %v283
    %v827 = vunpack.c.l.b16 %v284
    %v828 = vunpack.c.h.b16 %v284
    %v829 = vunpack.c.l.b16 %v285
    %v830 = vunpack.c.h.b16 %v285
    %v831 = vunpack.c.l.b16 %v286
    %v832 = vunpack.c.h.b16 %v286
    %v833 = vunpack.c.l.b16 %v287
    %v834 = vunpack.c.h.b16 %v287
    %v835 = vunpack.c.l.b16 %v288
    %v836 = vunpack.c.h.b16 %v288
    %v837 = vunpack.c.l.b16 %v289
    %v838 = vunpack.c.h.b16 %v289
    %v839 = vunpack.c.l.b16 %v290
    %v840 = vunpack.c.h.b16 %v290
    %v841 = vunpack.c.l.b16 %v291
    %v842 = vunpack.c.h.b16 %v291
    %v843 = vunpack.c.l.b16 %v292
    %v844 = vunpack.c.h.b16 %v292
    %v845 = vunpack.c.l.b16 %v293
    %v846 = vunpack.c.h.b16 %v293
    %v847 = vunpack.c.l.b16 %v294
    %v848 = vunpack.c.h.b16 %v294
    %v849 = vunpack.c.l.b16 %v295
    %v850 = vunpack.c.h.b16 %v295
    %v851 = vunpack.c.l.b16 %v296
    %v852 = vunpack.c.h.b16 %v296
    %v853 = vunpack.c.l.b16 %v297
    %v854 = vunpack.c.h.b16 %v297
    %v855 = vunpack.c.l.b16 %v298
    %v856 = vunpack.c.h.b16 %v298
    %v857 = vunpack.c.l.b16 %v299
    %v858 = vunpack.c.h.b16 %v299
    %v859 = vunpack.c.l.b16 %v300
    %v860 = vunpack.c.h.b16 %v300
    %v861 = vunpack.c.l.b16 %v301
    %v862 = vunpack.c.h.b16 %v301
    %v863 = vunpack.c.l.b16 %v302
    %v864 = vunpack.c.h.b16 %v302
    %v865 = vunpack.c.l.b16 %v303
    %v866 = vunpack.c.h.b16 %v303
    %v867 = vunpack.c.l.b16 %v304
    %v868 = vunpack.c.h.b16 %v304
    %v869 = vunpack.c.l.b16 %v305
    %v870 = vunpack.c.h.b16 %v305
    %v871 = vunpack.c.l.b16 %v306
    %v872 = vunpack.c.h.b16 %v306
    %v873 = vunpack.c.l.b16 %v307
    %v874 = vunpack.c.h.b16 %v307
    %v875 = vunpack.c.l.b16 %v308
    %v876 = vunpack.c.h.b16 %v308
    %v877 = vunpack.c.l.b16 %v309
    %v878 = vunpack.c.h.b16 %v309
    %v879 = vunpack.c.l.b16 %v310
    %v880 = vunpack.c.h.b16 %v310
    %v881 = vunpack.c.l.b16 %v311
    %v882 = vunpack.c.h.b16 %v311
    %v883 = vunpack.c.l.b16 %v312
    %v884 = vunpack.c.h.b16 %v312
    %v885 = vunpack.c.l.b16 %v313
    %v886 = vunpack.c.h.b16 %v313
    %v887 = vunpack.c.l.b16 %v314
    %v888 = vunpack.c.h.b16 %v314
    %v889 = vunpack.c.l.b16 %v315
    %v890 = vunpack.c.h.b16 %v315
    %v891 = vunpack.c.l.b16 %v316
    %v892 = vunpack.c.h.b16 %v316
    %v893 = vpack.c.b16 %v513, %v509
    %v894 = vpack.c.b16 %v514, %v510
    %v895 = vpack.c.b16 %v515, %v511
    %v896 = vpack.c.b16 %v516, %v512
    %v897 = vpack.c.b16 %v521, %v517
    %v898 = vpack.c.b16 %v522, %v518
    %v899 = vpack.c.b16 %v523, %v519
    %v900 = vpack.c.b16 %v524, %v520
    %v901 = vpack.c.b16 %v529, %v525
    %v902 = vpack.c.b16 %v530, %v526
    %v903 = vpack.c.b16 %v531, %v527
    %v904 = vpack.c.b16 %v532, %v528
    %v905 = vpack.c.b16 %v537, %v533
    %v906 = vpack.c.b16 %v538, %v534
    %v907 = vpack.c.b16 %v539, %v535
    %v908 = vpack.c.b16 %v540, %v536
    %v909 = vpack.c.b16 %v545, %v541
    %v910 = vpack.c.b16 %v546, %v542
    %v911 = vpack.c.b16 %v547, %v543
    %v912 = vpack.c.b16 %v548, %v544
    %v913 = vpack.c.b16 %v553, %v549
    %v914 = vpack.c.b16 %v554, %v550
    %v915 = vpack.c.b16 %v555, %v551
    %v916 = vpack.c.b16 %v556, %v552
    %v917 = vpack.c.b16 %v561, %v557
    %v918 = vpack.c.b16 %v562, %v558
    %v919 = vpack.c.b16 %v563, %v559
    %v920 = vpack.c.b16 %v564, %v560
    %v921 = vpack.c.b16 %v569, %v565
    %v922 = vpack.c.b16 %v570, %v566
    %v923 = vpack.c.b16 %v571, %v567
    %v924 = vpack.c.b16 %v572, %v568
    %v925 = vpack.c.b16 %v577, %v573
    %v926 = vpack.c.b16 %v578, %v574
    %v927 = vpack.c.b16 %v579, %v575
    %v928 = vpack.c.b16 %v580, %v576
    %v929 = vpack.c.b16 %v585, %v581
    %v930 = vpack.c.b16 %v586, %v582
    %v931 = vpack.c.b16 %v587, %v583
    %v932 = vpack.c.b16 %v588, %v584
    %v933 = vpack.c.b16 %v593, %v589
    %v934 = vpack.c.b16 %v594, %v590
    %v935 = vpack.c.b16 %v595, %v591
    %v936 = vpack.c.b16 %v596, %v592
    %v937 = vpack.c.b16 %v601, %v597
    %v938 = vpack.c.b16 %v602, %v598
    %v939 = vpack.c.b16 %v603, %v599
    %v940 = vpack.c.b16 %v604, %v600
    %v941 = vpack.c.b16 %v609, %v605
    %v942 = vpack.c.b16 %v610, %v606
    %v943 = vpack.c.b16 %v611, %v607
    %v944 = vpack.c.b16 %v612, %v608
    %v945 = vpack.c.b16 %v617, %v613
    %v946 = vpack.c.b16 %v618, %v614
    %v947 = vpack.c.b16 %v619, %v615
    %v948 = vpack.c.b16 %v620, %v616
    %v949 = vpack.c.b16 %v625, %v621
    %v950 = vpack.c.b16 %v626, %v622
    %v951 = vpack.c.b16 %v627, %v623
    %v952 = vpack.c.b16 %v628, %v624
    %v953 = vpack.c.b16 %v633, %v629
    %v954 = vpack.c.b16 %v634, %v630
    %v955 = vpack.c.b16 %v635, %v631
    %v956 = vpack.c.b16 %v636, %v632
    %v957 = vpack.c.b16 %v641, %v637
    %v958 = vpack.c.b16 %v642, %v638
    %v959 = vpack.c.b16 %v643, %v639
    %v960 = vpack.c.b16 %v644, %v640
    %v961 = vpack.c.b16 %v649, %v645
    %v962 = vpack.c.b16 %v650, %v646
    %v963 = vpack.c.b16 %v651, %v647
    %v964 = vpack.c.b16 %v652, %v648
    %v965 = vpack.c.b16 %v657, %v653
    %v966 = vpack.c.b16 %v658, %v654
    %v967 = vpack.c.b16 %v659, %v655
    %v968 = vpack.c.b16 %v660, %v656
    %v969 = vpack.c.b16 %v665, %v661
    %v970 = vpack.c.b16 %v666, %v662
    %v971 = vpack.c.b16 %v667, %v663
    %v972 = vpack.c.b16 %v668, %v664
    %v973 = vpack.c.b16 %v673, %v669
    %v974 = vpack.c.b16 %v674, %v670
    %v975 = vpack.c.b16 %v675, %v671
    %v976 = vpack.c.b16 %v676, %v672
    %v977 = vpack.c.b16 %v681, %v677
    %v978 = vpack.c.b16 %v682, %v678
    %v979 = vpack.c.b16 %v683, %v679
    %v980 = vpack.c.b16 %v684, %v680
    %v981 = vpack.c.b16 %v689, %v685
    %v982 = vpack.c.b16 %v690, %v686
    %v983 = vpack.c.b16 %v691, %v687
    %v984 = vpack.c.b16 %v692, %v688
    %v985 = vpack.c.b16 %v697, %v693
    %v986 = vpack.c.b16 %v698, %v694
    %v987 = vpack.c.b16 %v699, %v695
    %v988 = vpack.c.b16 %v700, %v696
    %v989 = vpack.c.b16 %v705, %v701
    %v990 = vpack.c.b16 %v706, %v702
    %v991 = vpack.c.b16 %v707, %v703
    %v992 = vpack.c.b16 %v708, %v704
    %v993 = vpack.c.b16 %v713, %v709
    %v994 = vpack.c.b16 %v714, %v710
    %v995 = vpack.c.b16 %v715, %v711
    %v996 = vpack.c.b16 %v716, %v712
    %v997 = vpack.c.b16 %v721, %v717
    %v998 = vpack.c.b16 %v722, %v718
    %v999 = vpack.c.b16 %v723, %v719
    %v1000 = vpack.c.b16 %v724, %v720
    %v1001 = vpack.c.b16 %v729, %v725
    %v1002 = vpack.c.b16 %v730, %v726
    %v1003 = vpack.c.b16 %v731, %v727
    %v1004 = vpack.c.b16 %v732, %v728
    %v1005 = vpack.c.b16 %v737, %v733
    %v1006 = vpack.c.b16 %v738, %v734
    %v1007 = vpack.c.b16 %v739, %v735
    %v1008 = vpack.c.b16 %v740, %v736
    %v1009 = vpack.c.b16 %v745, %v741
    %v1010 = vpack.c.b16 %v746, %v742
    %v1011 = vpack.c.b16 %v747, %v743
    %v1012 = vpack.c.b16 %v748, %v744
    %v1013 = vpack.c.b16 %v753, %v749
    %v1014 = vpack.c.b16 %v754, %v750
    %v1015 = vpack.c.b16 %v755, %v751
    %v1016 = vpack.c.b16 %v756, %v752
    %v1017 = vpack.c.b16 %v761, %v757
    %v1018 = vpack.c.b16 %v762, %v758
    %v1019 = vpack.c.b16 %v763, %v759
    %v1020 = vpack.c.b16 %v764, %v760
    %v1021 = vpack.c.b16 %v769, %v765
    %v1022 = vpack.c.b16 %v770, %v766
    %v1023 = vpack.c.b16 %v771, %v767
    %v1024 = vpack.c.b16 %v772, %v768
    %v1025 = vpack.c.b16 %v777, %v773
    %v1026 = vpack.c.b16 %v778, %v774
    %v1027 = vpack.c.b16 %v779, %v775
    %v1028 = vpack.c.b16 %v780, %v776
    %v1029 = vpack.c.b16 %v785, %v781
    %v1030 = vpack.c.b16 %v786, %v782
    %v1031 = vpack.c.b16 %v787, %v783
    %v1032 = vpack.c.b16 %v788, %v784
    %v1033 = vpack.c.b16 %v793, %v789
    %v1034 = vpack.c.b16 %v794, %v790
    %v1035 = vpack.c.b16 %v795, %v791
    %v1036 = vpack.c.b16 %v796, %v792
    %v1037 = vpack.c.b16 %v801, %v797
    %v1038 = vpack.c.b16 %v802, %v798
    %v1039 = vpack.c.b16 %v803, %v799
    %v1040 = vpack.c.b16 %v804, %v800
    %v1041 = vpack.c.b16 %v809, %v805
    %v1042 = vpack.c.b16 %v810, %v806
    %v1043 = vpack.c.b16 %v811, %v807
    %v1044 = vpack.c.b16 %v812, %v808
    %v1045 = vpack.c.b16 %v817, %v813
    %v1046 = vpack.c.b16 %v818, %v814
    %v1047 = vpack.c.b16 %v819, %v815
    %v1048 = vpack.c.b16 %v820, %v816
    %v1049 = vpack.c.b16 %v825, %v821
    %v1050 = vpack.c.b16 %v826, %v822
    %v1051 = vpack.c.b16 %v827, %v823
    %v1052 = vpack.c.b16 %v828, %v824
    %v1053 = vpack.c.b16 %v833, %v829
    %v1054 = vpack.c.b16 %v834, %v830
    %v1055 = vpack.c.b16 %v835, %v831
    %v1056 = vpack.c.b16 %v836, %v832
    %v1057 = vpack.c.b16 %v841, %v837
    %v1058 = vpack.c.b16 %v842, %v838
    %v1059 = vpack.c.b16 %v843, %v839
    %v1060 = vpack.c.b16 %v844, %v840
    %v1061 = vpack.c.b16 %v849, %v845
    %v1062 = vpack.c.b16 %v850, %v846
    %v1063 = vpack.c.b16 %v851, %v847
    %v1064 = vpack.c.b16 %v852, %v848
    %v1065 = vpack.c.b16 %v857, %v853
    %v1066 = vpack.c.b16 %v858, %v854
    %v1067 = vpack.c.b16 %v859, %v855
    %v1068 = vpack.c.b16 %v860, %v856
    %v1069 = vpack.c.b16 %v865, %v861
    %v1070 = vpack.c.b16 %v866, %v862
    %v1071 = vpack.c.b16 %v867, %v863
    %v1072 = vpack.c.b16 %v868, %v864
    %v1073 = vpack.c.b16 %v873, %v869
    %v1074 = vpack.c.b16 %v874, %v870
    %v1075 = vpack.c.b16 %v875, %v871
    %v1076 = vpack.c.b16 %v876, %v872
    %v1077 = vpack.c.b16 %v881, %v877
    %v1078 = vpack.c.b16 %v882, %v878
    %v1079 = vpack.c.b16 %v883, %v879
    %v1080 = vpack.c.b16 %v884, %v880
    %v1081 = vpack.c.b16 %v889, %v885
    %v1082 = vpack.c.b16 %v890, %v886
    %v1083 = vpack.c.b16 %v891, %v887
    %v1084 = vpack.c.b16 %v892, %v888
    %1277 = vmatprep.subr.bf16.mxu0 %v922
    %1278 = vmatpush1.bf16.msra.mxu0 %v921
    %1279 = vmatprep.subr.bf16.mxu0 %v918
    %1280 = vmatpush1.bf16.msra.mxu0 %v917
    %1281 = vmatprep.subr.bf16.mxu0 %v914
    %1282 = vmatpush1.bf16.msra.mxu0 %v913
    %1283 = vmatprep.subr.bf16.mxu0 %v910
    %1284 = vmatpush1.bf16.msra.mxu0 %v909
    %1285 = vmatprep.subr.bf16.mxu0 %v906
    %1286 = vmatpush1.bf16.msra.mxu0 %v905
    %1287 = vmatprep.subr.bf16.mxu0 %v902
    %1288 = vmatpush1.bf16.msra.mxu0 %v901
    %1289 = vmatprep.subr.bf16.mxu0 %v898
    %1290 = vmatpush1.bf16.msra.mxu0 %v897
    %1291 = vmatprep.subr.bf16.mxu0 %v894
    %1292 = vmatpush1.bf16.msra.mxu0 %v893
    %1293 = vmatprep.subr.bf16.mxu0 %v954
    %1294 = vmatpush2.bf16.msra.mxu0 %v953
    %1295 = vmatprep.subr.bf16.mxu0 %v950
    %1296 = vmatpush2.bf16.msra.mxu0 %v949
    %1297 = vmatprep.subr.bf16.mxu0 %v946
    %1298 = vmatpush2.bf16.msra.mxu0 %v945
    %1299 = vmatprep.subr.bf16.mxu0 %v942
    %1300 = vmatpush2.bf16.msra.mxu0 %v941
    %1301 = vmatprep.subr.bf16.mxu0 %v938
    %1302 = vmatpush2.bf16.msra.mxu0 %v937
    %1303 = vmatprep.subr.bf16.mxu0 %v934
    %1304 = vmatpush2.bf16.msra.mxu0 %v933
    %1305 = vmatprep.subr.bf16.mxu0 %v930
    %1306 = vmatpush2.bf16.msra.mxu0 %v929
    %1307 = vmatprep.subr.bf16.mxu0 %v926
    %1308 = vmatpush2.bf16.msra.mxu0 %v925
    %1309 = vmatprep.mubr.bf16.mxu0 %v120
    %1310 = vmatmul.mubr.bf16.gmra.mxu0 %v119
    %v1311 = vpop.f32.mrf.mxu0
    %v1312 = vadd.f32 0.0, %v1311
    %v1313 = vpop.f32.mrf.mxu0
    %v1314 = vadd.f32 0.0, %v1313
    %v1315 = vpop.f32.mrf.mxu0
    %v1316 = vpop.f32.mrf.mxu0
    %1317 = vdwg.mxu0
    %1318 = vmatprep.subr.bf16.mxu0 %v986
    %1319 = vmatpush1.bf16.msra.mxu0 %v985
    %1320 = vmatprep.subr.bf16.mxu0 %v982
    %1321 = vmatpush1.bf16.msra.mxu0 %v981
    %1322 = vmatprep.subr.bf16.mxu0 %v978
    %1323 = vmatpush1.bf16.msra.mxu0 %v977
    %1324 = vmatprep.subr.bf16.mxu0 %v974
    %1325 = vmatpush1.bf16.msra.mxu0 %v973
    %1326 = vmatprep.subr.bf16.mxu0 %v970
    %1327 = vmatpush1.bf16.msra.mxu0 %v969
    %1328 = vmatprep.subr.bf16.mxu0 %v966
    %1329 = vmatpush1.bf16.msra.mxu0 %v965
    %1330 = vmatprep.subr.bf16.mxu0 %v962
    %1331 = vmatpush1.bf16.msra.mxu0 %v961
    %1332 = vmatprep.subr.bf16.mxu0 %v958
    %1333 = vmatpush1.bf16.msra.mxu0 %v957
    %1334 = vmatprep.subr.bf16.mxu0 %v1018
    %1335 = vmatpush2.bf16.msra.mxu0 %v1017
    %1336 = vmatprep.subr.bf16.mxu0 %v1014
    %1337 = vmatpush2.bf16.msra.mxu0 %v1013
    %1338 = vmatprep.subr.bf16.mxu0 %v1010
    %1339 = vmatpush2.bf16.msra.mxu0 %v1009
    %1340 = vmatprep.subr.bf16.mxu0 %v1006
    %1341 = vmatpush2.bf16.msra.mxu0 %v1005
    %1342 = vmatprep.subr.bf16.mxu0 %v1002
    %1343 = vmatpush2.bf16.msra.mxu0 %v1001
    %1344 = vmatprep.subr.bf16.mxu0 %v998
    %1345 = vmatpush2.bf16.msra.mxu0 %v997
    %1346 = vmatprep.subr.bf16.mxu0 %v994
    %1347 = vmatpush2.bf16.msra.mxu0 %v993
    %1348 = vmatprep.subr.bf16.mxu0 %v990
    %1349 = vmatpush2.bf16.msra.mxu0 %v989
    %1350 = vmatprep.mubr.bf16.mxu0 %v122
    %1351 = vmatmul.mubr.bf16.gmra.mxu0 %v121
    %v1352 = vpop.f32.mrf.mxu0
    %v1353 = vadd.f32 %v1312, %v1352
    %v1354 = vpop.f32.mrf.mxu0
    %v1355 = vadd.f32 %v1314, %v1354
    %v1356 = vpop.f32.mrf.mxu0
    %v1357 = vpop.f32.mrf.mxu0
    %1358 = vdwg.mxu0
    %1359 = vmatprep.subr.bf16.mxu0 %v1050
    %1360 = vmatpush1.bf16.msra.mxu0 %v1049
    %1361 = vmatprep.subr.bf16.mxu0 %v1046
    %1362 = vmatpush1.bf16.msra.mxu0 %v1045
    %1363 = vmatprep.subr.bf16.mxu0 %v1042
    %1364 = vmatpush1.bf16.msra.mxu0 %v1041
    %1365 = vmatprep.subr.bf16.mxu0 %v1038
    %1366 = vmatpush1.bf16.msra.mxu0 %v1037
    %1367 = vmatprep.subr.bf16.mxu0 %v1034
    %1368 = vmatpush1.bf16.msra.mxu0 %v1033
    %1369 = vmatprep.subr.bf16.mxu0 %v1030
    %1370 = vmatpush1.bf16.msra.mxu0 %v1029
    %1371 = vmatprep.subr.bf16.mxu0 %v1026
    %1372 = vmatpush1.bf16.msra.mxu0 %v1025
    %1373 = vmatprep.subr.bf16.mxu0 %v1022
    %1374 = vmatpush1.bf16.msra.mxu0 %v1021
    %1375 = vmatprep.subr.bf16.mxu0 %v1082
    %1376 = vmatpush2.bf16.msra.mxu0 %v1081
    %1377 = vmatprep.subr.bf16.mxu0 %v1078
    %1378 = vmatpush2.bf16.msra.mxu0 %v1077
    %1379 = vmatprep.subr.bf16.mxu0 %v1074
    %1380 = vmatpush2.bf16.msra.mxu0 %v1073
    %1381 = vmatprep.subr.bf16.mxu0 %v1070
    %1382 = vmatpush2.bf16.msra.mxu0 %v1069
    %1383 = vmatprep.subr.bf16.mxu0 %v1066
    %1384 = vmatpush2.bf16.msra.mxu0 %v1065
    %1385 = vmatprep.subr.bf16.mxu0 %v1062
    %1386 = vmatpush2.bf16.msra.mxu0 %v1061
    %1387 = vmatprep.subr.bf16.mxu0 %v1058
    %1388 = vmatpush2.bf16.msra.mxu0 %v1057
    %1389 = vmatprep.subr.bf16.mxu0 %v1054
    %1390 = vmatpush2.bf16.msra.mxu0 %v1053
    %1391 = vmatprep.mubr.bf16.mxu0 %v124
    %1392 = vmatmul.mubr.bf16.gmra.mxu0 %v123
    %v1393 = vpop.f32.mrf.mxu0
    %v1394 = vadd.f32 %v1353, %v1393
    %v1395 = vpop.f32.mrf.mxu0
    %v1396 = vadd.f32 %v1355, %v1395
    %v1397 = vpop.f32.mrf.mxu0
    %v1398 = vpop.f32.mrf.mxu0
    %1399 = vdwg.mxu0
    %1400 = vmatprep.subr.bf16.mxu0 %v924
    %1401 = vmatpush1.bf16.msra.mxu0 %v923
    %1402 = vmatprep.subr.bf16.mxu0 %v920
    %1403 = vmatpush1.bf16.msra.mxu0 %v919
    %1404 = vmatprep.subr.bf16.mxu0 %v916
    %1405 = vmatpush1.bf16.msra.mxu0 %v915
    %1406 = vmatprep.subr.bf16.mxu0 %v912
    %1407 = vmatpush1.bf16.msra.mxu0 %v911
    %1408 = vmatprep.subr.bf16.mxu0 %v908
    %1409 = vmatpush1.bf16.msra.mxu0 %v907
    %1410 = vmatprep.subr.bf16.mxu0 %v904
    %1411 = vmatpush1.bf16.msra.mxu0 %v903
    %1412 = vmatprep.subr.bf16.mxu0 %v900
    %1413 = vmatpush1.bf16.msra.mxu0 %v899
    %1414 = vmatprep.subr.bf16.mxu0 %v896
    %1415 = vmatpush1.bf16.msra.mxu0 %v895
    %1416 = vmatprep.subr.bf16.mxu0 %v956
    %1417 = vmatpush2.bf16.msra.mxu0 %v955
    %1418 = vmatprep.subr.bf16.mxu0 %v952
    %1419 = vmatpush2.bf16.msra.mxu0 %v951
    %1420 = vmatprep.subr.bf16.mxu0 %v948
    %1421 = vmatpush2.bf16.msra.mxu0 %v947
    %1422 = vmatprep.subr.bf16.mxu0 %v944
    %1423 = vmatpush2.bf16.msra.mxu0 %v943
    %1424 = vmatprep.subr.bf16.mxu0 %v940
    %1425 = vmatpush2.bf16.msra.mxu0 %v939
    %1426 = vmatprep.subr.bf16.mxu0 %v936
    %1427 = vmatpush2.bf16.msra.mxu0 %v935
    %1428 = vmatprep.subr.bf16.mxu0 %v932
    %1429 = vmatpush2.bf16.msra.mxu0 %v931
    %1430 = vmatprep.subr.bf16.mxu0 %v928
    %1431 = vmatpush2.bf16.msra.mxu0 %v927
    %1432 = vmatprep.mubr.bf16.mxu0 %v120
    %1433 = vmatmul.mubr.bf16.gmra.mxu0 %v119
    %v1434 = vpop.f32.mrf.mxu0
    %v1435 = vadd.f32 0.0, %v1434
    %v1436 = vpop.f32.mrf.mxu0
    %v1437 = vadd.f32 0.0, %v1436
    %v1438 = vpop.f32.mrf.mxu0
    %v1439 = vpop.f32.mrf.mxu0
    %1440 = vdwg.mxu0
    %1441 = vmatprep.subr.bf16.mxu0 %v988
    %1442 = vmatpush1.bf16.msra.mxu0 %v987
    %1443 = vmatprep.subr.bf16.mxu0 %v984
    %1444 = vmatpush1.bf16.msra.mxu0 %v983
    %1445 = vmatprep.subr.bf16.mxu0 %v980
    %1446 = vmatpush1.bf16.msra.mxu0 %v979
    %1447 = vmatprep.subr.bf16.mxu0 %v976
    %1448 = vmatpush1.bf16.msra.mxu0 %v975
    %1449 = vmatprep.subr.bf16.mxu0 %v972
    %1450 = vmatpush1.bf16.msra.mxu0 %v971
    %1451 = vmatprep.subr.bf16.mxu0 %v968
    %1452 = vmatpush1.bf16.msra.mxu0 %v967
    %1453 = vmatprep.subr.bf16.mxu0 %v964
    %1454 = vmatpush1.bf16.msra.mxu0 %v963
    %1455 = vmatprep.subr.bf16.mxu0 %v960
    %1456 = vmatpush1.bf16.msra.mxu0 %v959
    %1457 = vmatprep.subr.bf16.mxu0 %v1020
    %1458 = vmatpush2.bf16.msra.mxu0 %v1019
    %1459 = vmatprep.subr.bf16.mxu0 %v1016
    %1460 = vmatpush2.bf16.msra.mxu0 %v1015
    %1461 = vmatprep.subr.bf16.mxu0 %v1012
    %1462 = vmatpush2.bf16.msra.mxu0 %v1011
    %1463 = vmatprep.subr.bf16.mxu0 %v1008
    %1464 = vmatpush2.bf16.msra.mxu0 %v1007
    %1465 = vmatprep.subr.bf16.mxu0 %v1004
    %1466 = vmatpush2.bf16.msra.mxu0 %v1003
    %1467 = vmatprep.subr.bf16.mxu0 %v1000
    %1468 = vmatpush2.bf16.msra.mxu0 %v999
    %1469 = vmatprep.subr.bf16.mxu0 %v996
    %1470 = vmatpush2.bf16.msra.mxu0 %v995
    %1471 = vmatprep.subr.bf16.mxu0 %v992
    %1472 = vmatpush2.bf16.msra.mxu0 %v991
    %1473 = vmatprep.mubr.bf16.mxu0 %v122
    %1474 = vmatmul.mubr.bf16.gmra.mxu0 %v121
    %v1475 = vpop.f32.mrf.mxu0
    %v1476 = vadd.f32 %v1435, %v1475
    %v1477 = vpop.f32.mrf.mxu0
    %v1478 = vadd.f32 %v1437, %v1477
    %v1479 = vpop.f32.mrf.mxu0
    %v1480 = vpop.f32.mrf.mxu0
    %1481 = vdwg.mxu0
    %1482 = vmatprep.subr.bf16.mxu0 %v1052
    %1483 = vmatpush1.bf16.msra.mxu0 %v1051
    %1484 = vmatprep.subr.bf16.mxu0 %v1048
    %1485 = vmatpush1.bf16.msra.mxu0 %v1047
    %1486 = vmatprep.subr.bf16.mxu0 %v1044
    %1487 = vmatpush1.bf16.msra.mxu0 %v1043
    %1488 = vmatprep.subr.bf16.mxu0 %v1040
    %1489 = vmatpush1.bf16.msra.mxu0 %v1039
    %1490 = vmatprep.subr.bf16.mxu0 %v1036
    %1491 = vmatpush1.bf16.msra.mxu0 %v1035
    %1492 = vmatprep.subr.bf16.mxu0 %v1032
    %1493 = vmatpush1.bf16.msra.mxu0 %v1031
    %1494 = vmatprep.subr.bf16.mxu0 %v1028
    %1495 = vmatpush1.bf16.msra.mxu0 %v1027
    %1496 = vmatprep.subr.bf16.mxu0 %v1024
    %1497 = vmatpush1.bf16.msra.mxu0 %v1023
    %1498 = vmatprep.subr.bf16.mxu0 %v1084
    %1499 = vmatpush2.bf16.msra.mxu0 %v1083
    %1500 = vmatprep.subr.bf16.mxu0 %v1080
    %1501 = vmatpush2.bf16.msra.mxu0 %v1079
    %1502 = vmatprep.subr.bf16.mxu0 %v1076
    %1503 = vmatpush2.bf16.msra.mxu0 %v1075
    %1504 = vmatprep.subr.bf16.mxu0 %v1072
    %1505 = vmatpush2.bf16.msra.mxu0 %v1071
    %1506 = vmatprep.subr.bf16.mxu0 %v1068
    %1507 = vmatpush2.bf16.msra.mxu0 %v1067
    %1508 = vmatprep.subr.bf16.mxu0 %v1064
    %1509 = vmatpush2.bf16.msra.mxu0 %v1063
    %1510 = vmatprep.subr.bf16.mxu0 %v1060
    %1511 = vmatpush2.bf16.msra.mxu0 %v1059
    %1512 = vmatprep.subr.bf16.mxu0 %v1056
    %1513 = vmatpush2.bf16.msra.mxu0 %v1055
    %1514 = vmatprep.mubr.bf16.mxu0 %v124
    %1515 = vmatmul.mubr.bf16.gmra.mxu0 %v123
    %v1516 = vpop.f32.mrf.mxu0
    %v1517 = vadd.f32 %v1476, %v1516
    %v1518 = vpop.f32.mrf.mxu0
    %v1519 = vadd.f32 %v1478, %v1518
    %v1520 = vpop.f32.mrf.mxu0
    %v1521 = vpop.f32.mrf.mxu0
    %1522 = vdwg.mxu0
    %v1523 = vadd.f32 %v109, %v1394
    %v1524 = vadd.f32 %v110, %v1396
    %v1525 = vadd.f32 %v111, %v1517
    %v1526 = vadd.f32 %v112, %v1519
    %1527 = vst [vmem:[#allocation2] sm:$0xff] %v1523
    %1528 = vst [vmem:[#allocation2 + $0x8] sm:$0xff] %v1524
    %1529 = vst [vmem:[#allocation2 + $0x10] sm:$0xff] %v1525
    %1530 = vst [vmem:[#allocation2 + $0x18] sm:$0xff] %v1526
    // Predicated region
    $region50: #{_forward_call.1} parent=1 // pred_check
      %p1531 = pneg %p79
    $region51: #{_forward_call.1} parent=1 // pred_check_branch
      %1533 = sbr.rel (%p1531) target = $region53
    $region52: #{_forward_call.1} parent=1 // pred_region
      %v1534 = vld [vmem:[#allocation9] sm:$0xf]
      %v1535 = vunpack.c.l.bf16 %v1534
      %v1536 = vld [vmem:[#allocation2] sm:$0xff]
      %v1537 = vld [vmem:[#allocation2 + $0x8] sm:$0xff]
      %v1538 = vld [vmem:[#allocation2 + $0x10] sm:$0xff]
      %v1539 = vld [vmem:[#allocation2 + $0x18] sm:$0xff]
      %v1540 = vmax.f32 %v1536, 0.0
      %v1541 = vmax.f32 %v1537, 0.0
      %v1542 = vmax.f32 %v1538, 0.0
      %v1543 = vmax.f32 %v1539, 0.0
      %v1544 = vpack.c.bf16 %v1540, %v1540
      %v1545 = vpack.c.bf16 %v1541, %v1541
      %v1546 = vpack.c.bf16 %v1542, %v1542
      %v1547 = vpack.c.bf16 %v1543, %v1543
      %v1548 = vld [vmem:[#allocation8] sm:$0xff]
      %v1549 = vld [vmem:[#allocation8 + $0x8] sm:$0xff]
      %v1550 = vld [vmem:[#allocation8 + $0x10] sm:$0xff]
      %v1551 = vld [vmem:[#allocation8 + $0x18] sm:$0xff]
      %v1552 = vld [vmem:[#allocation8 + $0x20] sm:$0xff]
      %v1553 = vld [vmem:[#allocation8 + $0x28] sm:$0xff]
      %v1554 = vld [vmem:[#allocation8 + $0x30] sm:$0xff]
      %v1555 = vld [vmem:[#allocation8 + $0x38] sm:$0xff]
      %v1556 = vld [vmem:[#allocation8 + $0x40] sm:$0xff]
      %v1557 = vld [vmem:[#allocation8 + $0x48] sm:$0xff]
      %v1558 = vld [vmem:[#allocation8 + $0x50] sm:$0xff]
      %v1559 = vld [vmem:[#allocation8 + $0x58] sm:$0xff]
      %v1560 = vld [vmem:[#allocation8 + $0x60] sm:$0xff]
      %v1561 = vld [vmem:[#allocation8 + $0x68] sm:$0xff]
      %v1562 = vld [vmem:[#allocation8 + $0x70] sm:$0xff]
      %v1563 = vld [vmem:[#allocation8 + $0x78] sm:$0xff]
      %v1564 = vld [vmem:[#allocation8 + $0x80] sm:$0xff]
      %v1565 = vld [vmem:[#allocation8 + $0x88] sm:$0xff]
      %v1566 = vld [vmem:[#allocation8 + $0x90] sm:$0xff]
      %v1567 = vld [vmem:[#allocation8 + $0x98] sm:$0xff]
      %v1568 = vld [vmem:[#allocation8 + $0xa0] sm:$0xff]
      %v1569 = vld [vmem:[#allocation8 + $0xa8] sm:$0xff]
      %v1570 = vld [vmem:[#allocation8 + $0xb0] sm:$0xff]
      %v1571 = vld [vmem:[#allocation8 + $0xb8] sm:$0xff]
      %v1572 = vld [vmem:[#allocation8 + $0xc0] sm:$0xff]
      %v1573 = vld [vmem:[#allocation8 + $0xc8] sm:$0xff]
      %v1574 = vld [vmem:[#allocation8 + $0xd0] sm:$0xff]
      %v1575 = vld [vmem:[#allocation8 + $0xd8] sm:$0xff]
      %v1576 = vld [vmem:[#allocation8 + $0xe0] sm:$0xff]
      %v1577 = vld [vmem:[#allocation8 + $0xe8] sm:$0xff]
      %v1578 = vld [vmem:[#allocation8 + $0xf0] sm:$0xff]
      %v1579 = vld [vmem:[#allocation8 + $0xf8] sm:$0xff]
      %v1580 = vld [vmem:[#allocation8 + $0x100] sm:$0xff]
      %v1581 = vld [vmem:[#allocation8 + $0x108] sm:$0xff]
      %v1582 = vld [vmem:[#allocation8 + $0x110] sm:$0xff]
      %v1583 = vld [vmem:[#allocation8 + $0x118] sm:$0xff]
      %v1584 = vld [vmem:[#allocation8 + $0x120] sm:$0xff]
      %v1585 = vld [vmem:[#allocation8 + $0x128] sm:$0xff]
      %v1586 = vld [vmem:[#allocation8 + $0x130] sm:$0xff]
      %v1587 = vld [vmem:[#allocation8 + $0x138] sm:$0xff]
      %v1588 = vld [vmem:[#allocation8 + $0x140] sm:$0xff]
      %v1589 = vld [vmem:[#allocation8 + $0x148] sm:$0xff]
      %v1590 = vld [vmem:[#allocation8 + $0x150] sm:$0xff]
      %v1591 = vld [vmem:[#allocation8 + $0x158] sm:$0xff]
      %v1592 = vld [vmem:[#allocation8 + $0x160] sm:$0xff]
      %v1593 = vld [vmem:[#allocation8 + $0x168] sm:$0xff]
      %v1594 = vld [vmem:[#allocation8 + $0x170] sm:$0xff]
      %v1595 = vld [vmem:[#allocation8 + $0x178] sm:$0xff]
      %v1596 = vld [vmem:[#allocation8 + $0x180] sm:$0xff]
      %v1597 = vld [vmem:[#allocation8 + $0x188] sm:$0xff]
      %v1598 = vld [vmem:[#allocation8 + $0x190] sm:$0xff]
      %v1599 = vld [vmem:[#allocation8 + $0x198] sm:$0xff]
      %v1600 = vld [vmem:[#allocation8 + $0x1a0] sm:$0xff]
      %v1601 = vld [vmem:[#allocation8 + $0x1a8] sm:$0xff]
      %v1602 = vld [vmem:[#allocation8 + $0x1b0] sm:$0xff]
      %v1603 = vld [vmem:[#allocation8 + $0x1b8] sm:$0xff]
      %v1604 = vld [vmem:[#allocation8 + $0x1c0] sm:$0xff]
      %v1605 = vld [vmem:[#allocation8 + $0x1c8] sm:$0xff]
      %v1606 = vld [vmem:[#allocation8 + $0x1d0] sm:$0xff]
      %v1607 = vld [vmem:[#allocation8 + $0x1d8] sm:$0xff]
      %v1608 = vld [vmem:[#allocation8 + $0x1e0] sm:$0xff]
      %v1609 = vld [vmem:[#allocation8 + $0x1e8] sm:$0xff]
      %v1610 = vld [vmem:[#allocation8 + $0x1f0] sm:$0xff]
      %v1611 = vld [vmem:[#allocation8 + $0x1f8] sm:$0xff]
      %v1612 = vld [vmem:[#allocation8 + $0x200] sm:$0xff]
      %v1613 = vld [vmem:[#allocation8 + $0x208] sm:$0xff]
      %v1614 = vld [vmem:[#allocation8 + $0x210] sm:$0xff]
      %v1615 = vld [vmem:[#allocation8 + $0x218] sm:$0xff]
      %v1616 = vld [vmem:[#allocation8 + $0x220] sm:$0xff]
      %v1617 = vld [vmem:[#allocation8 + $0x228] sm:$0xff]
      %v1618 = vld [vmem:[#allocation8 + $0x230] sm:$0xff]
      %v1619 = vld [vmem:[#allocation8 + $0x238] sm:$0xff]
      %v1620 = vld [vmem:[#allocation8 + $0x240] sm:$0xff]
      %v1621 = vld [vmem:[#allocation8 + $0x248] sm:$0xff]
      %v1622 = vld [vmem:[#allocation8 + $0x250] sm:$0xff]
      %v1623 = vld [vmem:[#allocation8 + $0x258] sm:$0xff]
      %v1624 = vld [vmem:[#allocation8 + $0x260] sm:$0xff]
      %v1625 = vld [vmem:[#allocation8 + $0x268] sm:$0xff]
      %v1626 = vld [vmem:[#allocation8 + $0x270] sm:$0xff]
      %v1627 = vld [vmem:[#allocation8 + $0x278] sm:$0xff]
      %v1628 = vld [vmem:[#allocation8 + $0x280] sm:$0xff]
      %v1629 = vld [vmem:[#allocation8 + $0x288] sm:$0xff]
      %v1630 = vld [vmem:[#allocation8 + $0x290] sm:$0xff]
      %v1631 = vld [vmem:[#allocation8 + $0x298] sm:$0xff]
      %v1632 = vld [vmem:[#allocation8 + $0x2a0] sm:$0xff]
      %v1633 = vld [vmem:[#allocation8 + $0x2a8] sm:$0xff]
      %v1634 = vld [vmem:[#allocation8 + $0x2b0] sm:$0xff]
      %v1635 = vld [vmem:[#allocation8 + $0x2b8] sm:$0xff]
      %v1636 = vld [vmem:[#allocation8 + $0x2c0] sm:$0xff]
      %v1637 = vld [vmem:[#allocation8 + $0x2c8] sm:$0xff]
      %v1638 = vld [vmem:[#allocation8 + $0x2d0] sm:$0xff]
      %v1639 = vld [vmem:[#allocation8 + $0x2d8] sm:$0xff]
      %v1640 = vld [vmem:[#allocation8 + $0x2e0] sm:$0xff]
      %v1641 = vld [vmem:[#allocation8 + $0x2e8] sm:$0xff]
      %v1642 = vld [vmem:[#allocation8 + $0x2f0] sm:$0xff]
      %v1643 = vld [vmem:[#allocation8 + $0x2f8] sm:$0xff]
      %v1644 = vld [vmem:[#allocation8 + $0x300] sm:$0xff]
      %v1645 = vld [vmem:[#allocation8 + $0x308] sm:$0xff]
      %v1646 = vld [vmem:[#allocation8 + $0x310] sm:$0xff]
      %v1647 = vld [vmem:[#allocation8 + $0x318] sm:$0xff]
      %v1648 = vld [vmem:[#allocation8 + $0x320] sm:$0xff]
      %v1649 = vld [vmem:[#allocation8 + $0x328] sm:$0xff]
      %v1650 = vld [vmem:[#allocation8 + $0x330] sm:$0xff]
      %v1651 = vld [vmem:[#allocation8 + $0x338] sm:$0xff]
      %v1652 = vld [vmem:[#allocation8 + $0x340] sm:$0xff]
      %v1653 = vld [vmem:[#allocation8 + $0x348] sm:$0xff]
      %v1654 = vld [vmem:[#allocation8 + $0x350] sm:$0xff]
      %v1655 = vld [vmem:[#allocation8 + $0x358] sm:$0xff]
      %v1656 = vld [vmem:[#allocation8 + $0x360] sm:$0xff]
      %v1657 = vld [vmem:[#allocation8 + $0x368] sm:$0xff]
      %v1658 = vld [vmem:[#allocation8 + $0x370] sm:$0xff]
      %v1659 = vld [vmem:[#allocation8 + $0x378] sm:$0xff]
      %v1660 = vld [vmem:[#allocation8 + $0x380] sm:$0xff]
      %v1661 = vld [vmem:[#allocation8 + $0x388] sm:$0xff]
      %v1662 = vld [vmem:[#allocation8 + $0x390] sm:$0xff]
      %v1663 = vld [vmem:[#allocation8 + $0x398] sm:$0xff]
      %v1664 = vld [vmem:[#allocation8 + $0x3a0] sm:$0xff]
      %v1665 = vld [vmem:[#allocation8 + $0x3a8] sm:$0xff]
      %v1666 = vld [vmem:[#allocation8 + $0x3b0] sm:$0xff]
      %v1667 = vld [vmem:[#allocation8 + $0x3b8] sm:$0xff]
      %v1668 = vld [vmem:[#allocation8 + $0x3c0] sm:$0xff]
      %v1669 = vld [vmem:[#allocation8 + $0x3c8] sm:$0xff]
      %v1670 = vld [vmem:[#allocation8 + $0x3d0] sm:$0xff]
      %v1671 = vld [vmem:[#allocation8 + $0x3d8] sm:$0xff]
      %v1672 = vld [vmem:[#allocation8 + $0x3e0] sm:$0xff]
      %v1673 = vld [vmem:[#allocation8 + $0x3e8] sm:$0xff]
      %v1674 = vld [vmem:[#allocation8 + $0x3f0] sm:$0xff]
      %v1675 = vld [vmem:[#allocation8 + $0x3f8] sm:$0xff]
      %v1676 = vld [vmem:[%s4] sm:$0xf]
      %v1678 = vlaneseq
      %v1679 = vshrl.u32 %v1678, 7
      %v1680 = vsub.s32 0, %v1679
      %v1681 = vrot.slane %v1676, %v1680
      %v1682 = vlaneseq
      %v1683 = vshrl.u32 %v1682, 7
      %v1684 = vsub.s32 1, %v1683
      %v1685 = vrot.slane %v1676, %v1684
      %v1686 = vlaneseq
      %v1687 = vshrl.u32 %v1686, 7
      %v1688 = vsub.s32 2, %v1687
      %v1689 = vrot.slane %v1676, %v1688
      %v1690 = vlaneseq
      %v1691 = vshrl.u32 %v1690, 7
      %v1692 = vsub.s32 3, %v1691
      %v1693 = vrot.slane %v1676, %v1692
      %v1826 = vunpack.c.l.b16 %v1548
      %v1827 = vunpack.c.h.b16 %v1548
      %v1828 = vunpack.c.l.b16 %v1549
      %v1829 = vunpack.c.h.b16 %v1549
      %v1830 = vunpack.c.l.b16 %v1550
      %v1831 = vunpack.c.h.b16 %v1550
      %v1832 = vunpack.c.l.b16 %v1551
      %v1833 = vunpack.c.h.b16 %v1551
      %v1834 = vunpack.c.l.b16 %v1552
      %v1835 = vunpack.c.h.b16 %v1552
      %v1836 = vunpack.c.l.b16 %v1553
      %v1837 = vunpack.c.h.b16 %v1553
      %v1838 = vunpack.c.l.b16 %v1554
      %v1839 = vunpack.c.h.b16 %v1554
      %v1840 = vunpack.c.l.b16 %v1555
      %v1841 = vunpack.c.h.b16 %v1555
      %v1842 = vunpack.c.l.b16 %v1556
      %v1843 = vunpack.c.h.b16 %v1556
      %v1844 = vunpack.c.l.b16 %v1557
      %v1845 = vunpack.c.h.b16 %v1557
      %v1846 = vunpack.c.l.b16 %v1558
      %v1847 = vunpack.c.h.b16 %v1558
      %v1848 = vunpack.c.l.b16 %v1559
      %v1849 = vunpack.c.h.b16 %v1559
      %v1850 = vunpack.c.l.b16 %v1560
      %v1851 = vunpack.c.h.b16 %v1560
      %v1852 = vunpack.c.l.b16 %v1561
      %v1853 = vunpack.c.h.b16 %v1561
      %v1854 = vunpack.c.l.b16 %v1562
      %v1855 = vunpack.c.h.b16 %v1562
      %v1856 = vunpack.c.l.b16 %v1563
      %v1857 = vunpack.c.h.b16 %v1563
      %v1858 = vunpack.c.l.b16 %v1564
      %v1859 = vunpack.c.h.b16 %v1564
      %v1860 = vunpack.c.l.b16 %v1565
      %v1861 = vunpack.c.h.b16 %v1565
      %v1862 = vunpack.c.l.b16 %v1566
      %v1863 = vunpack.c.h.b16 %v1566
      %v1864 = vunpack.c.l.b16 %v1567
      %v1865 = vunpack.c.h.b16 %v1567
      %v1866 = vunpack.c.l.b16 %v1568
      %v1867 = vunpack.c.h.b16 %v1568
      %v1868 = vunpack.c.l.b16 %v1569
      %v1869 = vunpack.c.h.b16 %v1569
      %v1870 = vunpack.c.l.b16 %v1570
      %v1871 = vunpack.c.h.b16 %v1570
      %v1872 = vunpack.c.l.b16 %v1571
      %v1873 = vunpack.c.h.b16 %v1571
      %v1874 = vunpack.c.l.b16 %v1572
      %v1875 = vunpack.c.h.b16 %v1572
      %v1876 = vunpack.c.l.b16 %v1573
      %v1877 = vunpack.c.h.b16 %v1573
      %v1878 = vunpack.c.l.b16 %v1574
      %v1879 = vunpack.c.h.b16 %v1574
      %v1880 = vunpack.c.l.b16 %v1575
      %v1881 = vunpack.c.h.b16 %v1575
      %v1882 = vunpack.c.l.b16 %v1576
      %v1883 = vunpack.c.h.b16 %v1576
      %v1884 = vunpack.c.l.b16 %v1577
      %v1885 = vunpack.c.h.b16 %v1577
      %v1886 = vunpack.c.l.b16 %v1578
      %v1887 = vunpack.c.h.b16 %v1578
      %v1888 = vunpack.c.l.b16 %v1579
      %v1889 = vunpack.c.h.b16 %v1579
      %v1890 = vunpack.c.l.b16 %v1580
      %v1891 = vunpack.c.h.b16 %v1580
      %v1892 = vunpack.c.l.b16 %v1581
      %v1893 = vunpack.c.h.b16 %v1581
      %v1894 = vunpack.c.l.b16 %v1582
      %v1895 = vunpack.c.h.b16 %v1582
      %v1896 = vunpack.c.l.b16 %v1583
      %v1897 = vunpack.c.h.b16 %v1583
      %v1898 = vunpack.c.l.b16 %v1584
      %v1899 = vunpack.c.h.b16 %v1584
      %v1900 = vunpack.c.l.b16 %v1585
      %v1901 = vunpack.c.h.b16 %v1585
      %v1902 = vunpack.c.l.b16 %v1586
      %v1903 = vunpack.c.h.b16 %v1586
      %v1904 = vunpack.c.l.b16 %v1587
      %v1905 = vunpack.c.h.b16 %v1587
      %v1906 = vunpack.c.l.b16 %v1588
      %v1907 = vunpack.c.h.b16 %v1588
      %v1908 = vunpack.c.l.b16 %v1589
      %v1909 = vunpack.c.h.b16 %v1589
      %v1910 = vunpack.c.l.b16 %v1590
      %v1911 = vunpack.c.h.b16 %v1590
      %v1912 = vunpack.c.l.b16 %v1591
      %v1913 = vunpack.c.h.b16 %v1591
      %v1914 = vunpack.c.l.b16 %v1592
      %v1915 = vunpack.c.h.b16 %v1592
      %v1916 = vunpack.c.l.b16 %v1593
      %v1917 = vunpack.c.h.b16 %v1593
      %v1918 = vunpack.c.l.b16 %v1594
      %v1919 = vunpack.c.h.b16 %v1594
      %v1920 = vunpack.c.l.b16 %v1595
      %v1921 = vunpack.c.h.b16 %v1595
      %v1922 = vunpack.c.l.b16 %v1596
      %v1923 = vunpack.c.h.b16 %v1596
      %v1924 = vunpack.c.l.b16 %v1597
      %v1925 = vunpack.c.h.b16 %v1597
      %v1926 = vunpack.c.l.b16 %v1598
      %v1927 = vunpack.c.h.b16 %v1598
      %v1928 = vunpack.c.l.b16 %v1599
      %v1929 = vunpack.c.h.b16 %v1599
      %v1930 = vunpack.c.l.b16 %v1600
      %v1931 = vunpack.c.h.b16 %v1600
      %v1932 = vunpack.c.l.b16 %v1601
      %v1933 = vunpack.c.h.b16 %v1601
      %v1934 = vunpack.c.l.b16 %v1602
      %v1935 = vunpack.c.h.b16 %v1602
      %v1936 = vunpack.c.l.b16 %v1603
      %v1937 = vunpack.c.h.b16 %v1603
      %v1938 = vunpack.c.l.b16 %v1604
      %v1939 = vunpack.c.h.b16 %v1604
      %v1940 = vunpack.c.l.b16 %v1605
      %v1941 = vunpack.c.h.b16 %v1605
      %v1942 = vunpack.c.l.b16 %v1606
      %v1943 = vunpack.c.h.b16 %v1606
      %v1944 = vunpack.c.l.b16 %v1607
      %v1945 = vunpack.c.h.b16 %v1607
      %v1946 = vunpack.c.l.b16 %v1608
      %v1947 = vunpack.c.h.b16 %v1608
      %v1948 = vunpack.c.l.b16 %v1609
      %v1949 = vunpack.c.h.b16 %v1609
      %v1950 = vunpack.c.l.b16 %v1610
      %v1951 = vunpack.c.h.b16 %v1610
      %v1952 = vunpack.c.l.b16 %v1611
      %v1953 = vunpack.c.h.b16 %v1611
      %v1954 = vunpack.c.l.b16 %v1612
      %v1955 = vunpack.c.h.b16 %v1612
      %v1956 = vunpack.c.l.b16 %v1613
      %v1957 = vunpack.c.h.b16 %v1613
      %v1958 = vunpack.c.l.b16 %v1614
      %v1959 = vunpack.c.h.b16 %v1614
      %v1960 = vunpack.c.l.b16 %v1615
      %v1961 = vunpack.c.h.b16 %v1615
      %v1962 = vunpack.c.l.b16 %v1616
      %v1963 = vunpack.c.h.b16 %v1616
      %v1964 = vunpack.c.l.b16 %v1617
      %v1965 = vunpack.c.h.b16 %v1617
      %v1966 = vunpack.c.l.b16 %v1618
      %v1967 = vunpack.c.h.b16 %v1618
      %v1968 = vunpack.c.l.b16 %v1619
      %v1969 = vunpack.c.h.b16 %v1619
      %v1970 = vunpack.c.l.b16 %v1620
      %v1971 = vunpack.c.h.b16 %v1620
      %v1972 = vunpack.c.l.b16 %v1621
      %v1973 = vunpack.c.h.b16 %v1621
      %v1974 = vunpack.c.l.b16 %v1622
      %v1975 = vunpack.c.h.b16 %v1622
      %v1976 = vunpack.c.l.b16 %v1623
      %v1977 = vunpack.c.h.b16 %v1623
      %v1978 = vunpack.c.l.b16 %v1624
      %v1979 = vunpack.c.h.b16 %v1624
      %v1980 = vunpack.c.l.b16 %v1625
      %v1981 = vunpack.c.h.b16 %v1625
      %v1982 = vunpack.c.l.b16 %v1626
      %v1983 = vunpack.c.h.b16 %v1626
      %v1984 = vunpack.c.l.b16 %v1627
      %v1985 = vunpack.c.h.b16 %v1627
      %v1986 = vunpack.c.l.b16 %v1628
      %v1987 = vunpack.c.h.b16 %v1628
      %v1988 = vunpack.c.l.b16 %v1629
      %v1989 = vunpack.c.h.b16 %v1629
      %v1990 = vunpack.c.l.b16 %v1630
      %v1991 = vunpack.c.h.b16 %v1630
      %v1992 = vunpack.c.l.b16 %v1631
      %v1993 = vunpack.c.h.b16 %v1631
      %v1994 = vunpack.c.l.b16 %v1632
      %v1995 = vunpack.c.h.b16 %v1632
      %v1996 = vunpack.c.l.b16 %v1633
      %v1997 = vunpack.c.h.b16 %v1633
      %v1998 = vunpack.c.l.b16 %v1634
      %v1999 = vunpack.c.h.b16 %v1634
      %v2000 = vunpack.c.l.b16 %v1635
      %v2001 = vunpack.c.h.b16 %v1635
      %v2002 = vunpack.c.l.b16 %v1636
      %v2003 = vunpack.c.h.b16 %v1636
      %v2004 = vunpack.c.l.b16 %v1637
      %v2005 = vunpack.c.h.b16 %v1637
      %v2006 = vunpack.c.l.b16 %v1638
      %v2007 = vunpack.c.h.b16 %v1638
      %v2008 = vunpack.c.l.b16 %v1639
      %v2009 = vunpack.c.h.b16 %v1639
      %v2010 = vunpack.c.l.b16 %v1640
      %v2011 = vunpack.c.h.b16 %v1640
      %v2012 = vunpack.c.l.b16 %v1641
      %v2013 = vunpack.c.h.b16 %v1641
      %v2014 = vunpack.c.l.b16 %v1642
      %v2015 = vunpack.c.h.b16 %v1642
      %v2016 = vunpack.c.l.b16 %v1643
      %v2017 = vunpack.c.h.b16 %v1643
      %v2018 = vunpack.c.l.b16 %v1644
      %v2019 = vunpack.c.h.b16 %v1644
      %v2020 = vunpack.c.l.b16 %v1645
      %v2021 = vunpack.c.h.b16 %v1645
      %v2022 = vunpack.c.l.b16 %v1646
      %v2023 = vunpack.c.h.b16 %v1646
      %v2024 = vunpack.c.l.b16 %v1647
      %v2025 = vunpack.c.h.b16 %v1647
      %v2026 = vunpack.c.l.b16 %v1648
      %v2027 = vunpack.c.h.b16 %v1648
      %v2028 = vunpack.c.l.b16 %v1649
      %v2029 = vunpack.c.h.b16 %v1649
      %v2030 = vunpack.c.l.b16 %v1650
      %v2031 = vunpack.c.h.b16 %v1650
      %v2032 = vunpack.c.l.b16 %v1651
      %v2033 = vunpack.c.h.b16 %v1651
      %v2034 = vunpack.c.l.b16 %v1652
      %v2035 = vunpack.c.h.b16 %v1652
      %v2036 = vunpack.c.l.b16 %v1653
      %v2037 = vunpack.c.h.b16 %v1653
      %v2038 = vunpack.c.l.b16 %v1654
      %v2039 = vunpack.c.h.b16 %v1654
      %v2040 = vunpack.c.l.b16 %v1655
      %v2041 = vunpack.c.h.b16 %v1655
      %v2042 = vunpack.c.l.b16 %v1656
      %v2043 = vunpack.c.h.b16 %v1656
      %v2044 = vunpack.c.l.b16 %v1657
      %v2045 = vunpack.c.h.b16 %v1657
      %v2046 = vunpack.c.l.b16 %v1658
      %v2047 = vunpack.c.h.b16 %v1658
      %v2048 = vunpack.c.l.b16 %v1659
      %v2049 = vunpack.c.h.b16 %v1659
      %v2050 = vunpack.c.l.b16 %v1660
      %v2051 = vunpack.c.h.b16 %v1660
      %v2052 = vunpack.c.l.b16 %v1661
      %v2053 = vunpack.c.h.b16 %v1661
      %v2054 = vunpack.c.l.b16 %v1662
      %v2055 = vunpack.c.h.b16 %v1662
      %v2056 = vunpack.c.l.b16 %v1663
      %v2057 = vunpack.c.h.b16 %v1663
      %v2058 = vunpack.c.l.b16 %v1664
      %v2059 = vunpack.c.h.b16 %v1664
      %v2060 = vunpack.c.l.b16 %v1665
      %v2061 = vunpack.c.h.b16 %v1665
      %v2062 = vunpack.c.l.b16 %v1666
      %v2063 = vunpack.c.h.b16 %v1666
      %v2064 = vunpack.c.l.b16 %v1667
      %v2065 = vunpack.c.h.b16 %v1667
      %v2066 = vunpack.c.l.b16 %v1668
      %v2067 = vunpack.c.h.b16 %v1668
      %v2068 = vunpack.c.l.b16 %v1669
      %v2069 = vunpack.c.h.b16 %v1669
      %v2070 = vunpack.c.l.b16 %v1670
      %v2071 = vunpack.c.h.b16 %v1670
      %v2072 = vunpack.c.l.b16 %v1671
      %v2073 = vunpack.c.h.b16 %v1671
      %v2074 = vunpack.c.l.b16 %v1672
      %v2075 = vunpack.c.h.b16 %v1672
      %v2076 = vunpack.c.l.b16 %v1673
      %v2077 = vunpack.c.h.b16 %v1673
      %v2078 = vunpack.c.l.b16 %v1674
      %v2079 = vunpack.c.h.b16 %v1674
      %v2080 = vunpack.c.l.b16 %v1675
      %v2081 = vunpack.c.h.b16 %v1675
      %v2082 = vpack.c.b16 %v1830, %v1826
      %v2083 = vpack.c.b16 %v1831, %v1827
      %v2084 = vpack.c.b16 %v1832, %v1828
      %v2085 = vpack.c.b16 %v1833, %v1829
      %v2086 = vpack.c.b16 %v1838, %v1834
      %v2087 = vpack.c.b16 %v1839, %v1835
      %v2088 = vpack.c.b16 %v1840, %v1836
      %v2089 = vpack.c.b16 %v1841, %v1837
      %v2090 = vpack.c.b16 %v1846, %v1842
      %v2091 = vpack.c.b16 %v1847, %v1843
      %v2092 = vpack.c.b16 %v1848, %v1844
      %v2093 = vpack.c.b16 %v1849, %v1845
      %v2094 = vpack.c.b16 %v1854, %v1850
      %v2095 = vpack.c.b16 %v1855, %v1851
      %v2096 = vpack.c.b16 %v1856, %v1852
      %v2097 = vpack.c.b16 %v1857, %v1853
      %v2098 = vpack.c.b16 %v1862, %v1858
      %v2099 = vpack.c.b16 %v1863, %v1859
      %v2100 = vpack.c.b16 %v1864, %v1860
      %v2101 = vpack.c.b16 %v1865, %v1861
      %v2102 = vpack.c.b16 %v1870, %v1866
      %v2103 = vpack.c.b16 %v1871, %v1867
      %v2104 = vpack.c.b16 %v1872, %v1868
      %v2105 = vpack.c.b16 %v1873, %v1869
      %v2106 = vpack.c.b16 %v1878, %v1874
      %v2107 = vpack.c.b16 %v1879, %v1875
      %v2108 = vpack.c.b16 %v1880, %v1876
      %v2109 = vpack.c.b16 %v1881, %v1877
      %v2110 = vpack.c.b16 %v1886, %v1882
      %v2111 = vpack.c.b16 %v1887, %v1883
      %v2112 = vpack.c.b16 %v1888, %v1884
      %v2113 = vpack.c.b16 %v1889, %v1885
      %v2114 = vpack.c.b16 %v1894, %v1890
      %v2115 = vpack.c.b16 %v1895, %v1891
      %v2116 = vpack.c.b16 %v1896, %v1892
      %v2117 = vpack.c.b16 %v1897, %v1893
      %v2118 = vpack.c.b16 %v1902, %v1898
      %v2119 = vpack.c.b16 %v1903, %v1899
      %v2120 = vpack.c.b16 %v1904, %v1900
      %v2121 = vpack.c.b16 %v1905, %v1901
      %v2122 = vpack.c.b16 %v1910, %v1906
      %v2123 = vpack.c.b16 %v1911, %v1907
      %v2124 = vpack.c.b16 %v1912, %v1908
      %v2125 = vpack.c.b16 %v1913, %v1909
      %v2126 = vpack.c.b16 %v1918, %v1914
      %v2127 = vpack.c.b16 %v1919, %v1915
      %v2128 = vpack.c.b16 %v1920, %v1916
      %v2129 = vpack.c.b16 %v1921, %v1917
      %v2130 = vpack.c.b16 %v1926, %v1922
      %v2131 = vpack.c.b16 %v1927, %v1923
      %v2132 = vpack.c.b16 %v1928, %v1924
      %v2133 = vpack.c.b16 %v1929, %v1925
      %v2134 = vpack.c.b16 %v1934, %v1930
      %v2135 = vpack.c.b16 %v1935, %v1931
      %v2136 = vpack.c.b16 %v1936, %v1932
      %v2137 = vpack.c.b16 %v1937, %v1933
      %v2138 = vpack.c.b16 %v1942, %v1938
      %v2139 = vpack.c.b16 %v1943, %v1939
      %v2140 = vpack.c.b16 %v1944, %v1940
      %v2141 = vpack.c.b16 %v1945, %v1941
      %v2142 = vpack.c.b16 %v1950, %v1946
      %v2143 = vpack.c.b16 %v1951, %v1947
      %v2144 = vpack.c.b16 %v1952, %v1948
      %v2145 = vpack.c.b16 %v1953, %v1949
      %v2146 = vpack.c.b16 %v1958, %v1954
      %v2147 = vpack.c.b16 %v1959, %v1955
      %v2148 = vpack.c.b16 %v1960, %v1956
      %v2149 = vpack.c.b16 %v1961, %v1957
      %v2150 = vpack.c.b16 %v1966, %v1962
      %v2151 = vpack.c.b16 %v1967, %v1963
      %v2152 = vpack.c.b16 %v1968, %v1964
      %v2153 = vpack.c.b16 %v1969, %v1965
      %v2154 = vpack.c.b16 %v1974, %v1970
      %v2155 = vpack.c.b16 %v1975, %v1971
      %v2156 = vpack.c.b16 %v1976, %v1972
      %v2157 = vpack.c.b16 %v1977, %v1973
      %v2158 = vpack.c.b16 %v1982, %v1978
      %v2159 = vpack.c.b16 %v1983, %v1979
      %v2160 = vpack.c.b16 %v1984, %v1980
      %v2161 = vpack.c.b16 %v1985, %v1981
      %v2162 = vpack.c.b16 %v1990, %v1986
      %v2163 = vpack.c.b16 %v1991, %v1987
      %v2164 = vpack.c.b16 %v1992, %v1988
      %v2165 = vpack.c.b16 %v1993, %v1989
      %v2166 = vpack.c.b16 %v1998, %v1994
      %v2167 = vpack.c.b16 %v1999, %v1995
      %v2168 = vpack.c.b16 %v2000, %v1996
      %v2169 = vpack.c.b16 %v2001, %v1997
      %v2170 = vpack.c.b16 %v2006, %v2002
      %v2171 = vpack.c.b16 %v2007, %v2003
      %v2172 = vpack.c.b16 %v2008, %v2004
      %v2173 = vpack.c.b16 %v2009, %v2005
      %v2174 = vpack.c.b16 %v2014, %v2010
      %v2175 = vpack.c.b16 %v2015, %v2011
      %v2176 = vpack.c.b16 %v2016, %v2012
      %v2177 = vpack.c.b16 %v2017, %v2013
      %v2178 = vpack.c.b16 %v2022, %v2018
      %v2179 = vpack.c.b16 %v2023, %v2019
      %v2180 = vpack.c.b16 %v2024, %v2020
      %v2181 = vpack.c.b16 %v2025, %v2021
      %v2182 = vpack.c.b16 %v2030, %v2026
      %v2183 = vpack.c.b16 %v2031, %v2027
      %v2184 = vpack.c.b16 %v2032, %v2028
      %v2185 = vpack.c.b16 %v2033, %v2029
      %v2186 = vpack.c.b16 %v2038, %v2034
      %v2187 = vpack.c.b16 %v2039, %v2035
      %v2188 = vpack.c.b16 %v2040, %v2036
      %v2189 = vpack.c.b16 %v2041, %v2037
      %v2190 = vpack.c.b16 %v2046, %v2042
      %v2191 = vpack.c.b16 %v2047, %v2043
      %v2192 = vpack.c.b16 %v2048, %v2044
      %v2193 = vpack.c.b16 %v2049, %v2045
      %v2194 = vpack.c.b16 %v2054, %v2050
      %v2195 = vpack.c.b16 %v2055, %v2051
      %v2196 = vpack.c.b16 %v2056, %v2052
      %v2197 = vpack.c.b16 %v2057, %v2053
      %v2198 = vpack.c.b16 %v2062, %v2058
      %v2199 = vpack.c.b16 %v2063, %v2059
      %v2200 = vpack.c.b16 %v2064, %v2060
      %v2201 = vpack.c.b16 %v2065, %v2061
      %v2202 = vpack.c.b16 %v2070, %v2066
      %v2203 = vpack.c.b16 %v2071, %v2067
      %v2204 = vpack.c.b16 %v2072, %v2068
      %v2205 = vpack.c.b16 %v2073, %v2069
      %v2206 = vpack.c.b16 %v2078, %v2074
      %v2207 = vpack.c.b16 %v2079, %v2075
      %v2208 = vpack.c.b16 %v2080, %v2076
      %v2209 = vpack.c.b16 %v2081, %v2077
      %2338 = vmatprep.subr.bf16.mxu0 %v2111
      %2339 = vmatpush1.bf16.msra.mxu0 %v2110
      %2340 = vmatprep.subr.bf16.mxu0 %v2107
      %2341 = vmatpush1.bf16.msra.mxu0 %v2106
      %2342 = vmatprep.subr.bf16.mxu0 %v2103
      %2343 = vmatpush1.bf16.msra.mxu0 %v2102
      %2344 = vmatprep.subr.bf16.mxu0 %v2099
      %2345 = vmatpush1.bf16.msra.mxu0 %v2098
      %2346 = vmatprep.subr.bf16.mxu0 %v2095
      %2347 = vmatpush1.bf16.msra.mxu0 %v2094
      %2348 = vmatprep.subr.bf16.mxu0 %v2091
      %2349 = vmatpush1.bf16.msra.mxu0 %v2090
      %2350 = vmatprep.subr.bf16.mxu0 %v2087
      %2351 = vmatpush1.bf16.msra.mxu0 %v2086
      %2352 = vmatprep.subr.bf16.mxu0 %v2083
      %2353 = vmatpush1.bf16.msra.mxu0 %v2082
      %2354 = vmatprep.subr.bf16.mxu0 %v2143
      %2355 = vmatpush2.bf16.msra.mxu0 %v2142
      %2356 = vmatprep.subr.bf16.mxu0 %v2139
      %2357 = vmatpush2.bf16.msra.mxu0 %v2138
      %2358 = vmatprep.subr.bf16.mxu0 %v2135
      %2359 = vmatpush2.bf16.msra.mxu0 %v2134
      %2360 = vmatprep.subr.bf16.mxu0 %v2131
      %2361 = vmatpush2.bf16.msra.mxu0 %v2130
      %2362 = vmatprep.subr.bf16.mxu0 %v2127
      %2363 = vmatpush2.bf16.msra.mxu0 %v2126
      %2364 = vmatprep.subr.bf16.mxu0 %v2123
      %2365 = vmatpush2.bf16.msra.mxu0 %v2122
      %2366 = vmatprep.subr.bf16.mxu0 %v2119
      %2367 = vmatpush2.bf16.msra.mxu0 %v2118
      %2368 = vmatprep.subr.bf16.mxu0 %v2115
      %2369 = vmatpush2.bf16.msra.mxu0 %v2114
      %2370 = vmatprep.mubr.bf16.mxu0 %v1545
      %2371 = vmatmul.mubr.bf16.gmra.mxu0 %v1544
      %v2372 = vpop.f32.mrf.mxu0
      %v2373 = vadd.f32 %v1681, %v2372
      %v2374 = vpop.f32.mrf.mxu0
      %v2375 = vadd.f32 %v1685, %v2374
      %v2376 = vpop.f32.mrf.mxu0
      %v2377 = vpop.f32.mrf.mxu0
      %2378 = vdwg.mxu0
      %2379 = vmatprep.subr.bf16.mxu0 %v2175
      %2380 = vmatpush1.bf16.msra.mxu0 %v2174
      %2381 = vmatprep.subr.bf16.mxu0 %v2171
      %2382 = vmatpush1.bf16.msra.mxu0 %v2170
      %2383 = vmatprep.subr.bf16.mxu0 %v2167
      %2384 = vmatpush1.bf16.msra.mxu0 %v2166
      %2385 = vmatprep.subr.bf16.mxu0 %v2163
      %2386 = vmatpush1.bf16.msra.mxu0 %v2162
      %2387 = vmatprep.subr.bf16.mxu0 %v2159
      %2388 = vmatpush1.bf16.msra.mxu0 %v2158
      %2389 = vmatprep.subr.bf16.mxu0 %v2155
      %2390 = vmatpush1.bf16.msra.mxu0 %v2154
      %2391 = vmatprep.subr.bf16.mxu0 %v2151
      %2392 = vmatpush1.bf16.msra.mxu0 %v2150
      %2393 = vmatprep.subr.bf16.mxu0 %v2147
      %2394 = vmatpush1.bf16.msra.mxu0 %v2146
      %2395 = vmatprep.subr.bf16.mxu0 %v2207
      %2396 = vmatpush2.bf16.msra.mxu0 %v2206
      %2397 = vmatprep.subr.bf16.mxu0 %v2203
      %2398 = vmatpush2.bf16.msra.mxu0 %v2202
      %2399 = vmatprep.subr.bf16.mxu0 %v2199
      %2400 = vmatpush2.bf16.msra.mxu0 %v2198
      %2401 = vmatprep.subr.bf16.mxu0 %v2195
      %2402 = vmatpush2.bf16.msra.mxu0 %v2194
      %2403 = vmatprep.subr.bf16.mxu0 %v2191
      %2404 = vmatpush2.bf16.msra.mxu0 %v2190
      %2405 = vmatprep.subr.bf16.mxu0 %v2187
      %2406 = vmatpush2.bf16.msra.mxu0 %v2186
      %2407 = vmatprep.subr.bf16.mxu0 %v2183
      %2408 = vmatpush2.bf16.msra.mxu0 %v2182
      %2409 = vmatprep.subr.bf16.mxu0 %v2179
      %2410 = vmatpush2.bf16.msra.mxu0 %v2178
      %2411 = vmatprep.mubr.bf16.mxu0 %v1547
      %2412 = vmatmul.mubr.bf16.gmra.mxu0 %v1546
      %v2413 = vpop.f32.mrf.mxu0
      %v2414 = vadd.f32 %v2373, %v2413
      %v2415 = vpop.f32.mrf.mxu0
      %v2416 = vadd.f32 %v2375, %v2415
      %v2417 = vpop.f32.mrf.mxu0
      %v2418 = vpop.f32.mrf.mxu0
      %2419 = vdwg.mxu0
      %2420 = vmatprep.subr.bf16.mxu0 %v2113
      %2421 = vmatpush1.bf16.msra.mxu0 %v2112
      %2422 = vmatprep.subr.bf16.mxu0 %v2109
      %2423 = vmatpush1.bf16.msra.mxu0 %v2108
      %2424 = vmatprep.subr.bf16.mxu0 %v2105
      %2425 = vmatpush1.bf16.msra.mxu0 %v2104
      %2426 = vmatprep.subr.bf16.mxu0 %v2101
      %2427 = vmatpush1.bf16.msra.mxu0 %v2100
      %2428 = vmatprep.subr.bf16.mxu0 %v2097
      %2429 = vmatpush1.bf16.msra.mxu0 %v2096
      %2430 = vmatprep.subr.bf16.mxu0 %v2093
      %2431 = vmatpush1.bf16.msra.mxu0 %v2092
      %2432 = vmatprep.subr.bf16.mxu0 %v2089
      %2433 = vmatpush1.bf16.msra.mxu0 %v2088
      %2434 = vmatprep.subr.bf16.mxu0 %v2085
      %2435 = vmatpush1.bf16.msra.mxu0 %v2084
      %2436 = vmatprep.subr.bf16.mxu0 %v2145
      %2437 = vmatpush2.bf16.msra.mxu0 %v2144
      %2438 = vmatprep.subr.bf16.mxu0 %v2141
      %2439 = vmatpush2.bf16.msra.mxu0 %v2140
      %2440 = vmatprep.subr.bf16.mxu0 %v2137
      %2441 = vmatpush2.bf16.msra.mxu0 %v2136
      %2442 = vmatprep.subr.bf16.mxu0 %v2133
      %2443 = vmatpush2.bf16.msra.mxu0 %v2132
      %2444 = vmatprep.subr.bf16.mxu0 %v2129
      %2445 = vmatpush2.bf16.msra.mxu0 %v2128
      %2446 = vmatprep.subr.bf16.mxu0 %v2125
      %2447 = vmatpush2.bf16.msra.mxu0 %v2124
      %2448 = vmatprep.subr.bf16.mxu0 %v2121
      %2449 = vmatpush2.bf16.msra.mxu0 %v2120
      %2450 = vmatprep.subr.bf16.mxu0 %v2117
      %2451 = vmatpush2.bf16.msra.mxu0 %v2116
      %2452 = vmatprep.mubr.bf16.mxu0 %v1545
      %2453 = vmatmul.mubr.bf16.gmra.mxu0 %v1544
      %v2454 = vpop.f32.mrf.mxu0
      %v2455 = vadd.f32 %v1689, %v2454
      %v2456 = vpop.f32.mrf.mxu0
      %v2457 = vadd.f32 %v1693, %v2456
      %v2458 = vpop.f32.mrf.mxu0
      %v2459 = vpop.f32.mrf.mxu0
      %2460 = vdwg.mxu0
      %2461 = vmatprep.subr.bf16.mxu0 %v2177
      %2462 = vmatpush1.bf16.msra.mxu0 %v2176
      %2463 = vmatprep.subr.bf16.mxu0 %v2173
      %2464 = vmatpush1.bf16.msra.mxu0 %v2172
      %2465 = vmatprep.subr.bf16.mxu0 %v2169
      %2466 = vmatpush1.bf16.msra.mxu0 %v2168
      %2467 = vmatprep.subr.bf16.mxu0 %v2165
      %2468 = vmatpush1.bf16.msra.mxu0 %v2164
      %2469 = vmatprep.subr.bf16.mxu0 %v2161
      %2470 = vmatpush1.bf16.msra.mxu0 %v2160
      %2471 = vmatprep.subr.bf16.mxu0 %v2157
      %2472 = vmatpush1.bf16.msra.mxu0 %v2156
      %2473 = vmatprep.subr.bf16.mxu0 %v2153
      %2474 = vmatpush1.bf16.msra.mxu0 %v2152
      %2475 = vmatprep.subr.bf16.mxu0 %v2149
      %2476 = vmatpush1.bf16.msra.mxu0 %v2148
      %2477 = vmatprep.subr.bf16.mxu0 %v2209
      %2478 = vmatpush2.bf16.msra.mxu0 %v2208
      %2479 = vmatprep.subr.bf16.mxu0 %v2205
      %2480 = vmatpush2.bf16.msra.mxu0 %v2204
      %2481 = vmatprep.subr.bf16.mxu0 %v2201
      %2482 = vmatpush2.bf16.msra.mxu0 %v2200
      %2483 = vmatprep.subr.bf16.mxu0 %v2197
      %2484 = vmatpush2.bf16.msra.mxu0 %v2196
      %2485 = vmatprep.subr.bf16.mxu0 %v2193
      %2486 = vmatpush2.bf16.msra.mxu0 %v2192
      %2487 = vmatprep.subr.bf16.mxu0 %v2189
      %2488 = vmatpush2.bf16.msra.mxu0 %v2188
      %2489 = vmatprep.subr.bf16.mxu0 %v2185
      %2490 = vmatpush2.bf16.msra.mxu0 %v2184
      %2491 = vmatprep.subr.bf16.mxu0 %v2181
      %2492 = vmatpush2.bf16.msra.mxu0 %v2180
      %2493 = vmatprep.mubr.bf16.mxu0 %v1547
      %2494 = vmatmul.mubr.bf16.gmra.mxu0 %v1546
      %v2495 = vpop.f32.mrf.mxu0
      %v2496 = vadd.f32 %v2455, %v2495
      %v2497 = vpop.f32.mrf.mxu0
      %v2498 = vadd.f32 %v2457, %v2497
      %v2499 = vpop.f32.mrf.mxu0
      %v2500 = vpop.f32.mrf.mxu0
      %2501 = vdwg.mxu0
      %v2502 = vmax.f32 %v2414, 0.0
      %v2503 = vmax.f32 %v2416, 0.0
      %v2504 = vmax.f32 %v2496, 0.0
      %v2505 = vmax.f32 %v2498, 0.0
      %v2507 = vlaneseq
      %v2508 = vshrl.u32 %v2507, 7
      %v2509 = vsub.s32 0, %v2508
      %v2510 = vrot.slane %v1535, %v2509
      %v2511 = vlaneseq
      %v2512 = vshrl.u32 %v2511, 7
      %v2513 = vsub.s32 2, %v2512
      %v2514 = vrot.slane %v1535, %v2513
      %v2515 = vlaneseq
      %v2516 = vshrl.u32 %v2515, 7
      %v2517 = vsub.s32 4, %v2516
      %v2518 = vrot.slane %v1535, %v2517
      %v2519 = vlaneseq
      %v2520 = vshrl.u32 %v2519, 7
      %v2521 = vsub.s32 6, %v2520
      %v2522 = vrot.slane %v1535, %v2521
      %v2527 = vlaneseq
      %v2528 = vshrl.u32 %v2527, 7
      %v2529 = vsub.s32 0, %v2528
      %v2530 = vrot.slane %v2510, %v2529
      %v2531 = vlaneseq
      %v2532 = vshrl.u32 %v2531, 7
      %v2533 = vsub.s32 0, %v2532
      %v2534 = vrot.slane %v2514, %v2533
      %v2535 = vlaneseq
      %v2536 = vshrl.u32 %v2535, 7
      %v2537 = vsub.s32 0, %v2536
      %v2538 = vrot.slane %v2518, %v2537
      %v2539 = vlaneseq
      %v2540 = vshrl.u32 %v2539, 7
      %v2541 = vsub.s32 0, %v2540
      %v2542 = vrot.slane %v2522, %v2541
      %v2543 = vmul.f32 %v2502, %v2530
      %v2544 = vmul.f32 %v2503, %v2534
      %v2545 = vmul.f32 %v2504, %v2538
      %v2546 = vmul.f32 %v2505, %v2542
      %v2547 = vadd.f32 %v2543, %v2544
      %v2548 = vadd.f32 %v2547, %v2545
      %v2549 = vadd.f32 %v2548, %v2546
      %2550 = vadd.xlane.f32.xlu0 %v2549
      %v2551 = vpop.xlane.xlu0 %2550
      %v2552 = vld [vmem:[#allocation3] sm:$0x1]
      %v2554 = vlaneseq
      %v2555 = vshrl.u32 %v2554, 7
      %v2556 = vsub.s32 0, %v2555
      %v2557 = vrot.slane %v2552, %v2556
      %v2559 = vadd.f32 %v2551, %v2557
      %vm2560 = vcmask 7168
      %2561 = vst.msk [vmem:[%s7] sm:$0xff] %vm2560, %v2559
    $region53: #{_forward_call.1} parent=1 // pred_fallthru
      _
    // Predicated region
    $region54: #{_forward_call.1} parent=1 // pred_check
      _
    $region55: #{_forward_call.1} parent=1 // pred_check_branch
      %2563 = sbr.rel (0) target = $region57
    $region56: #{_forward_call.1} parent=1 // pred_region
      _
    $region57: #{_forward_call.1} parent=1 // pred_fallthru
      _
    // Predicated region
    $region58: #{_forward_call.1} parent=1 // pred_check
      _
    $region59: #{_forward_call.1} parent=1 // pred_check_branch
      %2565 = sbr.rel (0) target = $region61
    $region60: #{_forward_call.1} parent=1 // pred_region
      _
    $region61: #{_forward_call.1} parent=1 // pred_fallthru
      _
    %2566 = vsyncpa [#allocation5], 1
    %2567 = vsyncpa [#allocation7], 1
    %2568 = vsyncpa [#allocation10], 1

</llo_original>
